<compile_context>
chip_gen: v7x
topology: tpu7x:2x2x1
jax: 0.10.0
libtpu: 0.0.40
codegen_flags: <defaults>
</compile_context>

<pallas_src>
import functools

import numpy as np
import jax
import jax.numpy as jnp
from jax import lax
from jax.experimental import pallas as pl
from jax.experimental.pallas import tpu as pltpu


@functools.lru_cache(maxsize=None)
def _dft_mats(n):
    """Ortho-normalized symmetric 1-D DFT matrix F = A + i*B as bf16 MXU operands."""
    k = np.arange(n)
    f = np.exp(-2j * np.pi * np.outer(k, k) / n) / np.sqrt(n)
    return (jnp.asarray(f.real, dtype=jnp.bfloat16),
            jnp.asarray(f.imag, dtype=jnp.bfloat16))


def _dft_fwd_kernel(x_ref, aw_ref, bw_ref, ah_ref, bh_ref, spec_ref, *, C, H, W):
    """Separable forward fft2 (norm='ortho') for one batch element.

    x_ref:    (1, C, H, W) bf16
    aw/bw:    (W, W) bf16 (real/imag of the W-axis DFT matrix), ah/bh: (H, H) bf16
    spec_ref: (1, 2C, W, H) f32 -- [Re ; Im] channels, spatial stored (w, h)
    """
    x = x_ref[0].reshape(C * H, W)                                       # bf16

    # DFT along W (minor axis):  T = X @ (Aw + i*Bw)
    tr = jnp.dot(x, aw_ref[...], preferred_element_type=jnp.float32)     # (C*H, W)
    ti = jnp.dot(x, bw_ref[...], preferred_element_type=jnp.float32)

    # DFT along H: move to the transposed spatial layout (c, w, h) so the contraction
    # stays on the lane axis; the [real ; imag] stack halves the number of MXU calls.
    t = jnp.concatenate([tr, ti], axis=0)                                # (2*C*H, W)
    t = jnp.swapaxes(t.reshape(2 * C, H, W), 1, 2)                       # (2*C, W, H)
    t = t.reshape(2 * C * W, H).astype(jnp.bfloat16)
    pa = jnp.dot(t, ah_ref[...], preferred_element_type=jnp.float32)     # (2*C*W, H)
    pb = jnp.dot(t, bh_ref[...], preferred_element_type=jnp.float32)
    n = C * W
    yr = pa[:n] - pb[n:]            # Re(fft2(x))  in (c, w, h) layout
    yi = pa[n:] + pb[:n]            # Im(fft2(x))
    spec_ref[...] = jnp.concatenate([yr, yi], axis=0).reshape(1, 2 * C, W, H)


def _conv_stats_kernel(spec_ref, w_ref, conv_ref, s1_ref, s2_ref):
    """1x1 conv over the [Re ; Im] channel stack + per-batch BatchNorm partial sums.

    spec_ref: (1, 2C, S) f32 (lane-dense), w_ref: (2CO, 2C) f32
    conv_ref: (1, 2CO, S) f32, s1/s2: (1, 2CO, 1) f32
    """
    f = spec_ref[0]                                                       # (2C, S)
    conv = jnp.dot(w_ref[...], f, preferred_element_type=jnp.float32)     # (2CO, S)
    conv_ref[...] = conv[None]
    s1_ref[...] = jnp.sum(conv, axis=1, keepdims=True)[None]
    s2_ref[...] = jnp.sum(conv * conv, axis=1, keepdims=True)[None]


def _bn_relu_idft_kernel(conv_ref, scale_ref, shift_ref, aw_ref, bw_ref,
                         ah_ref, bh_ref, o_ref, *, CO, H, W):
    """Folded BatchNorm + ReLU + separable ifft2 (norm='ortho') real part, per batch.

    conv_ref:    (1, 2CO, W, H) f32 spectra (spatial stored (w, h))
    scale/shift: (2CO, 1, 1) f32 folded-BN affine
    o_ref:       (1, CO, H, W) f32
    """
    conv = conv_ref[0]                                                    # (2CO, W, H)
    y = jnp.maximum(conv * scale_ref[...] + shift_ref[...], 0.0)

    # rows = (channel, w), minor = h; first CO channels are Re, last CO are Im.
    z = y.reshape(2 * CO * W, H).astype(jnp.bfloat16)
    # inverse DFT along H:  V = conj(Fh) @ Z
    pa = jnp.dot(z, ah_ref[...], preferred_element_type=jnp.float32)      # (2*CO*W, H)
    pb = jnp.dot(z, bh_ref[...], preferred_element_type=jnp.float32)
    m = CO * W
    vr = pa[:m] + pb[m:]            # Ah@Zr + Bh@Zi   (layout (co, w, h))
    vi = pa[m:] - pb[:m]            # Ah@Zi - Bh@Zr

    # back to (co, h, w) with one batched transpose, then inverse DFT along W.
    v = jnp.concatenate([vr, vi], axis=0)                                  # (2*CO*W, H)
    v = jnp.swapaxes(v.reshape(2 * CO, W, H), 1, 2)                        # (2*CO, H, W)
    v = v.reshape(2 * CO * H, W).astype(jnp.bfloat16)
    qa = jnp.dot(v, aw_ref[...], preferred_element_type=jnp.float32)       # (2*CO*H, W)
    qb = jnp.dot(v, bw_ref[...], preferred_element_type=jnp.float32)
    m2 = CO * H
    o_ref[...] = (qa[:m2] + qb[m2:]).reshape(1, CO, H, W)   # Re(V @ conj(Fw)) = Vr@Aw + Vi@Bw


@functools.partial(jax.jit, static_argnames=("eps",))
def fourier_unit(x, conv_w, gamma, beta, eps=1e-5):
    """x: (B, C, H, W) f32.  conv_w: (2*CO, 2*C).  gamma/beta: (2*CO,)."""
    B, C, H, W = x.shape
    CO = conv_w.shape[0] // 2
    S = H * W

    aw, bw = _dft_mats(W)
    ah, bh = _dft_mats(H)
    xb = x.astype(jnp.bfloat16)            # halve x HBM->VMEM traffic; MXU is bf16-native
    wc = conv_w.astype(jnp.float32)

    mat_w = pl.BlockSpec((W, W), lambda b: (0, 0))     # constant index_map: fetched once
    mat_h = pl.BlockSpec((H, H), lambda b: (0, 0))
    parallel = pltpu.CompilerParams(dimension_semantics=("parallel",))

    # --- kernel 1: separable forward DFT, one batch element per grid step -------------
    spec = pl.pallas_call(
        functools.partial(_dft_fwd_kernel, C=C, H=H, W=W),
        grid=(B,),
        in_specs=[pl.BlockSpec((1, C, H, W), lambda b: (b, 0, 0, 0)),
                  mat_w, mat_w, mat_h, mat_h],
        out_specs=pl.BlockSpec((1, 2 * C, W, H), lambda b: (b, 0, 0, 0)),
        out_shape=jax.ShapeDtypeStruct((B, 2 * C, W, H), jnp.float32),
        compiler_params=parallel,
    )(xb, aw, bw, ah, bh)

    # Free contiguous reshape: gives the channel-mixing matmul a lane-dense (2C, S) view.
    spec_m = spec.reshape(B, 2 * C, S)

    # --- kernel 2: 1x1 conv (single MXU matmul per batch) + BN partial sums ------------
    conv, s1, s2 = pl.pallas_call(
        _conv_stats_kernel,
        grid=(B,),
        in_specs=[pl.BlockSpec((1, 2 * C, S), lambda b: (b, 0, 0)),
                  pl.BlockSpec((2 * CO, 2 * C), lambda b: (0, 0))],
        out_specs=[pl.BlockSpec((1, 2 * CO, S), lambda b: (b, 0, 0)),
                   pl.BlockSpec((1, 2 * CO, 1), lambda b: (b, 0, 0)),
                   pl.BlockSpec((1, 2 * CO, 1), lambda b: (b, 0, 0))],
        out_shape=[jax.ShapeDtypeStruct((B, 2 * CO, S), jnp.float32),
                   jax.ShapeDtypeStruct((B, 2 * CO, 1), jnp.float32),
                   jax.ShapeDtypeStruct((B, 2 * CO, 1), jnp.float32)],
        compiler_params=parallel,
    )(spec_m, wc)

    # --- BatchNorm2d (training mode, biased batch statistics) folded to scale/shift ----
    cnt = float(B * S)
    mean = jnp.sum(s1, axis=(0, 2)) / cnt
    var = jnp.sum(s2, axis=(0, 2)) / cnt - mean * mean
    scale = gamma.astype(jnp.float32) * lax.rsqrt(var + eps)
    shift = beta.astype(jnp.float32) - mean * scale

    conv4 = conv.reshape(B, 2 * CO, W, H)   # free reshape back to the split-spatial view

    # --- kernel 3: folded BN + ReLU + separable inverse DFT (real part) ----------------
    out = pl.pallas_call(
        functools.partial(_bn_relu_idft_kernel, CO=CO, H=H, W=W),
        grid=(B,),
        in_specs=[pl.BlockSpec((1, 2 * CO, W, H), lambda b: (b, 0, 0, 0)),
                  pl.BlockSpec((2 * CO, 1, 1), lambda b: (0, 0, 0)),
                  pl.BlockSpec((2 * CO, 1, 1), lambda b: (0, 0, 0)),
                  mat_w, mat_w, mat_h, mat_h],
        out_specs=pl.BlockSpec((1, CO, H, W), lambda b: (b, 0, 0, 0)),
        out_shape=jax.ShapeDtypeStruct((B, CO, H, W), jnp.float32),
        compiler_params=parallel,
    )(conv4, scale.reshape(2 * CO, 1, 1), shift.reshape(2 * CO, 1, 1),
      aw, bw, ah, bh)

    return out


def fourier_unit_ref(x, conv_w, gamma, beta, eps=1e-5):
    """Pure-JAX reference mirroring the PyTorch forward (BN in training mode)."""
    B, C, H, W = x.shape
    CO = conv_w.shape[0] // 2
    ff = jnp.fft.fft2(x, norm="ortho")
    f = jnp.concatenate([jnp.real(ff), jnp.imag(ff)], axis=1)        # (B, 2C, H, W)
    conv = jnp.einsum("oc,bchw->bohw", conv_w, f)                    # 1x1 conv, no bias
    mean = conv.mean(axis=(0, 2, 3), keepdims=True)
    var = ((conv - mean) ** 2).mean(axis=(0, 2, 3), keepdims=True)
    y = (conv - mean) / jnp.sqrt(var + eps)
    y = y * gamma.reshape(1, -1, 1, 1) + beta.reshape(1, -1, 1, 1)
    y = jnp.maximum(y, 0.0)
    zr, zi = y[:, :CO], y[:, CO:]
    out = jnp.fft.ifft2(zr + 1j * zi, s=(H, W), norm="ortho")
    return jnp.real(out).astype(jnp.float32)


if __name__ == "__main__":
    B, C_IN, C_OUT, H, W = 2, 4, 4, 16, 16

    key = jax.random.PRNGKey(0)
    kx, kw = jax.random.split(key)
    x = jax.random.normal(kx, (B, C_IN, H, W), dtype=jnp.float32)

    # Conv2d(2*C_IN -> 2*C_OUT, kernel=1, bias=False): kaiming-uniform-like init.
    fan_in = 2 * C_IN
    bound = 1.0 / float(np.sqrt(fan_in))
    conv_w = jax.random.uniform(kw, (2 * C_OUT, 2 * C_IN),
                                minval=-bound, maxval=bound, dtype=jnp.float32)
    # BatchNorm2d(2*C_OUT) default affine init.
    gamma = jnp.ones((2 * C_OUT,), dtype=jnp.float32)
    beta = jnp.zeros((2 * C_OUT,), dtype=jnp.float32)

    out = jax.block_until_ready(fourier_unit(x, conv_w, gamma, beta))
    ref = jax.block_until_ready(fourier_unit_ref(x, conv_w, gamma, beta))

    assert out.shape == (B, C_OUT, H, W)
    # bf16 MXU operands (f32 accumulation) through the 4 DFT stages -> ~1e-2-scale error.
    err = float(jnp.max(jnp.abs(out - ref)))
    assert jnp.allclose(out, ref, atol=2e-2, rtol=2e-2), err
    print("KERNEL_OK")
</pallas_src>

<mosaic_0001>
module attributes {stable_mosaic.version = 11 : i64} {
  func.func @_dft_fwd_kernel(%arg0: i32, %arg1: memref<1x4x16x16xbf16, #tpu.memory_space<vmem>>, %arg2: memref<16x16xbf16, #tpu.memory_space<vmem>>, %arg3: memref<16x16xbf16, #tpu.memory_space<vmem>>, %arg4: memref<16x16xbf16, #tpu.memory_space<vmem>>, %arg5: memref<16x16xbf16, #tpu.memory_space<vmem>>, %arg6: memref<1x8x16x16xf32, #tpu.memory_space<vmem>>) attributes {dimension_semantics = [#tpu.dimension_semantics<parallel>], iteration_bounds = array<i64: 2>, scalar_prefetch = 0 : i64, scratch_operands = 0 : i64, tpu.core_type = #tpu.core_type<tc>, window_params = [{transform_indices = @transform_0, window_bounds = array<i64: 1, 4, 16, 16>}, {pipeline_mode = #tpu.pipeline_mode<synchronous>, transform_indices = @transform_1, window_bounds = array<i64: 16, 16>}, {pipeline_mode = #tpu.pipeline_mode<synchronous>, transform_indices = @transform_2, window_bounds = array<i64: 16, 16>}, {pipeline_mode = #tpu.pipeline_mode<synchronous>, transform_indices = @transform_3, window_bounds = array<i64: 16, 16>}, {pipeline_mode = #tpu.pipeline_mode<synchronous>, transform_indices = @transform_4, window_bounds = array<i64: 16, 16>}, {transform_indices = @transform_5, window_bounds = array<i64: 1, 8, 16, 16>}]} {
    %c0 = arith.constant 0 : index
    %c0_0 = arith.constant 0 : index
    %c0_1 = arith.constant 0 : index
    %c0_2 = arith.constant 0 : index
    %0 = vector.load %arg1[%c0, %c0_0, %c0_1, %c0_2] : memref<1x4x16x16xbf16, #tpu.memory_space<vmem>>, vector<1x4x16x16xbf16>
    %1 = vector.shape_cast %0 : vector<1x4x16x16xbf16> to vector<4x16x16xbf16>
    %2 = vector.shape_cast %1 : vector<4x16x16xbf16> to vector<64x16xbf16>
    %c0_3 = arith.constant 0 : index
    %c0_4 = arith.constant 0 : index
    %3 = vector.load %arg2[%c0_3, %c0_4] : memref<16x16xbf16, #tpu.memory_space<vmem>>, vector<16x16xbf16>
    %cst = arith.constant dense<0.000000e+00> : vector<64x16xf32>
    %4 = tpu.matmul %2, %3, %cst {dimension_numbers = #tpu.dot_dimension_numbers<[1], [0], [0], [1], [0, 0, 1, 1], [], []>} : vector<64x16xbf16>, vector<16x16xbf16>, vector<64x16xf32> -> vector<64x16xf32>
    %c0_5 = arith.constant 0 : index
    %c0_6 = arith.constant 0 : index
    %5 = vector.load %arg3[%c0_5, %c0_6] : memref<16x16xbf16, #tpu.memory_space<vmem>>, vector<16x16xbf16>
    %cst_7 = arith.constant dense<0.000000e+00> : vector<64x16xf32>
    %6 = tpu.matmul %2, %5, %cst_7 {dimension_numbers = #tpu.dot_dimension_numbers<[1], [0], [0], [1], [0, 0, 1, 1], [], []>} : vector<64x16xbf16>, vector<16x16xbf16>, vector<64x16xf32> -> vector<64x16xf32>
    %7 = tpu.concatenate %4, %6 in 0 : vector<64x16xf32>, vector<64x16xf32> -> vector<128x16xf32>
    %8 = vector.shape_cast %7 : vector<128x16xf32> to vector<8x16x16xf32>
    %9 = tpu.transpose %8, [0, 2, 1] : vector<8x16x16xf32> -> vector<8x16x16xf32>
    %10 = vector.shape_cast %9 : vector<8x16x16xf32> to vector<128x16xf32>
    %11 = arith.truncf %10 : vector<128x16xf32> to vector<128x16xbf16>
    %c0_8 = arith.constant 0 : index
    %c0_9 = arith.constant 0 : index
    %12 = vector.load %arg4[%c0_8, %c0_9] : memref<16x16xbf16, #tpu.memory_space<vmem>>, vector<16x16xbf16>
    %cst_10 = arith.constant dense<0.000000e+00> : vector<128x16xf32>
    %13 = tpu.matmul %11, %12, %cst_10 {dimension_numbers = #tpu.dot_dimension_numbers<[1], [0], [0], [1], [0, 0, 1, 1], [], []>} : vector<128x16xbf16>, vector<16x16xbf16>, vector<128x16xf32> -> vector<128x16xf32>
    %c0_11 = arith.constant 0 : index
    %c0_12 = arith.constant 0 : index
    %14 = vector.load %arg5[%c0_11, %c0_12] : memref<16x16xbf16, #tpu.memory_space<vmem>>, vector<16x16xbf16>
    %cst_13 = arith.constant dense<0.000000e+00> : vector<128x16xf32>
    %15 = tpu.matmul %11, %14, %cst_13 {dimension_numbers = #tpu.dot_dimension_numbers<[1], [0], [0], [1], [0, 0, 1, 1], [], []>} : vector<128x16xbf16>, vector<16x16xbf16>, vector<128x16xf32> -> vector<128x16xf32>
    %16 = vector.extract_strided_slice %13 {offsets = [0, 0], sizes = [64, 16], strides = [1, 1]} : vector<128x16xf32> to vector<64x16xf32>
    %17 = vector.extract_strided_slice %15 {offsets = [64, 0], sizes = [64, 16], strides = [1, 1]} : vector<128x16xf32> to vector<64x16xf32>
    %18 = arith.subf %16, %17 : vector<64x16xf32>
    %19 = vector.extract_strided_slice %13 {offsets = [64, 0], sizes = [64, 16], strides = [1, 1]} : vector<128x16xf32> to vector<64x16xf32>
    %20 = vector.extract_strided_slice %15 {offsets = [0, 0], sizes = [64, 16], strides = [1, 1]} : vector<128x16xf32> to vector<64x16xf32>
    %21 = arith.addf %19, %20 : vector<64x16xf32>
    %22 = tpu.concatenate %18, %21 in 0 : vector<64x16xf32>, vector<64x16xf32> -> vector<128x16xf32>
    %23 = vector.shape_cast %22 : vector<128x16xf32> to vector<1x8x16x16xf32>
    %c0_14 = arith.constant 0 : index
    %c0_15 = arith.constant 0 : index
    %c0_16 = arith.constant 0 : index
    %c0_17 = arith.constant 0 : index
    %24 = vector.load %arg6[%c0_14, %c0_15, %c0_16, %c0_17] : memref<1x8x16x16xf32, #tpu.memory_space<vmem>>, vector<1x8x16x16xf32>
    tpu.vector_store %arg6[%c0_14, %c0_15, %c0_16, %c0_17], %23 {strides = array<i32>} : memref<1x8x16x16xf32, #tpu.memory_space<vmem>>, vector<1x8x16x16xf32>,
    return
  }
  func.func @transform_0(%arg0: i32) -> (i32, i32, i32, i32) {
    %c0_i32 = arith.constant 0 : i32
    %c0_i32_0 = arith.constant 0 : i32
    %c0_i32_1 = arith.constant 0 : i32
    %c0_i32_2 = arith.constant 0 : i32
    return %arg0, %c0_i32, %c0_i32_0, %c0_i32_1 : i32, i32, i32, i32
  }
  func.func @transform_1(%arg0: i32) -> (i32, i32) {
    %c0_i32 = arith.constant 0 : i32
    %c0_i32_0 = arith.constant 0 : i32
    %c0_i32_1 = arith.constant 0 : i32
    return %c0_i32, %c0_i32_0 : i32, i32
  }
  func.func @transform_2(%arg0: i32) -> (i32, i32) {
    %c0_i32 = arith.constant 0 : i32
    %c0_i32_0 = arith.constant 0 : i32
    %c0_i32_1 = arith.constant 0 : i32
    return %c0_i32, %c0_i32_0 : i32, i32
  }
  func.func @transform_3(%arg0: i32) -> (i32, i32) {
    %c0_i32 = arith.constant 0 : i32
    %c0_i32_0 = arith.constant 0 : i32
    %c0_i32_1 = arith.constant 0 : i32
    return %c0_i32, %c0_i32_0 : i32, i32
  }
  func.func @transform_4(%arg0: i32) -> (i32, i32) {
    %c0_i32 = arith.constant 0 : i32
    %c0_i32_0 = arith.constant 0 : i32
    %c0_i32_1 = arith.constant 0 : i32
    return %c0_i32, %c0_i32_0 : i32, i32
  }
  func.func @transform_5(%arg0: i32) -> (i32, i32, i32, i32) {
    %c0_i32 = arith.constant 0 : i32
    %c0_i32_0 = arith.constant 0 : i32
    %c0_i32_1 = arith.constant 0 : i32
    %c0_i32_2 = arith.constant 0 : i32
    return %arg0, %c0_i32, %c0_i32_0, %c0_i32_1 : i32, i32, i32, i32
  }
}

module attributes {stable_mosaic.version = 11 : i64} {
  func.func @_conv_stats_kernel(%arg0: i32, %arg1: memref<1x8x256xf32, #tpu.memory_space<vmem>>, %arg2: memref<8x8xf32, #tpu.memory_space<vmem>>, %arg3: memref<1x8x256xf32, #tpu.memory_space<vmem>>, %arg4: memref<1x8x1xf32, #tpu.memory_space<vmem>>, %arg5: memref<1x8x1xf32, #tpu.memory_space<vmem>>) attributes {dimension_semantics = [#tpu.dimension_semantics<parallel>], iteration_bounds = array<i64: 2>, scalar_prefetch = 0 : i64, scratch_operands = 0 : i64, tpu.core_type = #tpu.core_type<tc>, window_params = [{transform_indices = @transform_0, window_bounds = array<i64: 1, 8, 256>}, {pipeline_mode = #tpu.pipeline_mode<synchronous>, transform_indices = @transform_1, window_bounds = array<i64: 8, 8>}, {transform_indices = @transform_2, window_bounds = array<i64: 1, 8, 256>}, {transform_indices = @transform_3, window_bounds = array<i64: 1, 8, 1>}, {transform_indices = @transform_4, window_bounds = array<i64: 1, 8, 1>}]} {
    %c0 = arith.constant 0 : index
    %c0_0 = arith.constant 0 : index
    %c0_1 = arith.constant 0 : index
    %0 = vector.load %arg1[%c0, %c0_0, %c0_1] : memref<1x8x256xf32, #tpu.memory_space<vmem>>, vector<1x8x256xf32>
    %1 = vector.shape_cast %0 : vector<1x8x256xf32> to vector<8x256xf32>
    %c0_2 = arith.constant 0 : index
    %c0_3 = arith.constant 0 : index
    %2 = vector.load %arg2[%c0_2, %c0_3] : memref<8x8xf32, #tpu.memory_space<vmem>>, vector<8x8xf32>
    %cst = arith.constant dense<0.000000e+00> : vector<8x256xf32>
    %3 = tpu.matmul %2, %1, %cst {dimension_numbers = #tpu.dot_dimension_numbers<[1], [0], [0], [1], [0, 0, 1, 1], [], []>} : vector<8x8xf32>, vector<8x256xf32>, vector<8x256xf32> -> vector<8x256xf32>
    %4 = vector.shape_cast %3 : vector<8x256xf32> to vector<1x8x256xf32>
    %c0_4 = arith.constant 0 : index
    %c0_5 = arith.constant 0 : index
    %c0_6 = arith.constant 0 : index
    %5 = vector.load %arg3[%c0_4, %c0_5, %c0_6] : memref<1x8x256xf32, #tpu.memory_space<vmem>>, vector<1x8x256xf32>
    tpu.vector_store %arg3[%c0_4, %c0_5, %c0_6], %4 {strides = array<i32>} : memref<1x8x256xf32, #tpu.memory_space<vmem>>, vector<1x8x256xf32>,
    %cst_7 = arith.constant dense<0.000000e+00> : vector<8xf32>
    %6 = vector.multi_reduction <add>, %3, %cst_7 [1] : vector<8x256xf32> to vector<8xf32>
    %7 = vector.shape_cast %6 : vector<8xf32> to vector<8x1xf32>
    %8 = vector.shape_cast %7 : vector<8x1xf32> to vector<1x8x1xf32>
    %c0_8 = arith.constant 0 : index
    %c0_9 = arith.constant 0 : index
    %c0_10 = arith.constant 0 : index
    %9 = vector.load %arg4[%c0_8, %c0_9, %c0_10] : memref<1x8x1xf32, #tpu.memory_space<vmem>>, vector<1x8x1xf32>
    tpu.vector_store %arg4[%c0_8, %c0_9, %c0_10], %8 {strides = array<i32>} : memref<1x8x1xf32, #tpu.memory_space<vmem>>, vector<1x8x1xf32>,
    %10 = arith.mulf %3, %3 : vector<8x256xf32>
    %cst_11 = arith.constant dense<0.000000e+00> : vector<8xf32>
    %11 = vector.multi_reduction <add>, %10, %cst_11 [1] : vector<8x256xf32> to vector<8xf32>
    %12 = vector.shape_cast %11 : vector<8xf32> to vector<8x1xf32>
    %13 = vector.shape_cast %12 : vector<8x1xf32> to vector<1x8x1xf32>
    %c0_12 = arith.constant 0 : index
    %c0_13 = arith.constant 0 : index
    %c0_14 = arith.constant 0 : index
    %14 = vector.load %arg5[%c0_12, %c0_13, %c0_14] : memref<1x8x1xf32, #tpu.memory_space<vmem>>, vector<1x8x1xf32>
    tpu.vector_store %arg5[%c0_12, %c0_13, %c0_14], %13 {strides = array<i32>} : memref<1x8x1xf32, #tpu.memory_space<vmem>>, vector<1x8x1xf32>,
    return
  }
  func.func @transform_0(%arg0: i32) -> (i32, i32, i32) {
    %c0_i32 = arith.constant 0 : i32
    %c0_i32_0 = arith.constant 0 : i32
    %c0_i32_1 = arith.constant 0 : i32
    return %arg0, %c0_i32, %c0_i32_0 : i32, i32, i32
  }
  func.func @transform_1(%arg0: i32) -> (i32, i32) {
    %c0_i32 = arith.constant 0 : i32
    %c0_i32_0 = arith.constant 0 : i32
    %c0_i32_1 = arith.constant 0 : i32
    return %c0_i32, %c0_i32_0 : i32, i32
  }
  func.func @transform_2(%arg0: i32) -> (i32, i32, i32) {
    %c0_i32 = arith.constant 0 : i32
    %c0_i32_0 = arith.constant 0 : i32
    %c0_i32_1 = arith.constant 0 : i32
    return %arg0, %c0_i32, %c0_i32_0 : i32, i32, i32
  }
  func.func @transform_3(%arg0: i32) -> (i32, i32, i32) {
    %c0_i32 = arith.constant 0 : i32
    %c0_i32_0 = arith.constant 0 : i32
    %c0_i32_1 = arith.constant 0 : i32
    return %arg0, %c0_i32, %c0_i32_0 : i32, i32, i32
  }
  func.func @transform_4(%arg0: i32) -> (i32, i32, i32) {
    %c0_i32 = arith.constant 0 : i32
    %c0_i32_0 = arith.constant 0 : i32
    %c0_i32_1 = arith.constant 0 : i32
    return %arg0, %c0_i32, %c0_i32_0 : i32, i32, i32
  }
}

module attributes {stable_mosaic.version = 11 : i64} {
  func.func @_bn_relu_idft_kernel(%arg0: i32, %arg1: memref<1x8x16x16xf32, #tpu.memory_space<vmem>>, %arg2: memref<8x1x1xf32, #tpu.memory_space<vmem>>, %arg3: memref<8x1x1xf32, #tpu.memory_space<vmem>>, %arg4: memref<16x16xbf16, #tpu.memory_space<vmem>>, %arg5: memref<16x16xbf16, #tpu.memory_space<vmem>>, %arg6: memref<16x16xbf16, #tpu.memory_space<vmem>>, %arg7: memref<16x16xbf16, #tpu.memory_space<vmem>>, %arg8: memref<1x4x16x16xf32, #tpu.memory_space<vmem>>) attributes {dimension_semantics = [#tpu.dimension_semantics<parallel>], iteration_bounds = array<i64: 2>, scalar_prefetch = 0 : i64, scratch_operands = 0 : i64, tpu.core_type = #tpu.core_type<tc>, window_params = [{transform_indices = @transform_0, window_bounds = array<i64: 1, 8, 16, 16>}, {pipeline_mode = #tpu.pipeline_mode<synchronous>, transform_indices = @transform_1, window_bounds = array<i64: 8, 1, 1>}, {pipeline_mode = #tpu.pipeline_mode<synchronous>, transform_indices = @transform_2, window_bounds = array<i64: 8, 1, 1>}, {pipeline_mode = #tpu.pipeline_mode<synchronous>, transform_indices = @transform_3, window_bounds = array<i64: 16, 16>}, {pipeline_mode = #tpu.pipeline_mode<synchronous>, transform_indices = @transform_4, window_bounds = array<i64: 16, 16>}, {pipeline_mode = #tpu.pipeline_mode<synchronous>, transform_indices = @transform_5, window_bounds = array<i64: 16, 16>}, {pipeline_mode = #tpu.pipeline_mode<synchronous>, transform_indices = @transform_6, window_bounds = array<i64: 16, 16>}, {transform_indices = @transform_7, window_bounds = array<i64: 1, 4, 16, 16>}]} {
    %c0 = arith.constant 0 : index
    %c0_0 = arith.constant 0 : index
    %c0_1 = arith.constant 0 : index
    %c0_2 = arith.constant 0 : index
    %0 = vector.load %arg1[%c0, %c0_0, %c0_1, %c0_2] : memref<1x8x16x16xf32, #tpu.memory_space<vmem>>, vector<1x8x16x16xf32>
    %1 = vector.shape_cast %0 : vector<1x8x16x16xf32> to vector<8x16x16xf32>
    %c0_3 = arith.constant 0 : index
    %c0_4 = arith.constant 0 : index
    %c0_5 = arith.constant 0 : index
    %2 = vector.load %arg2[%c0_3, %c0_4, %c0_5] : memref<8x1x1xf32, #tpu.memory_space<vmem>>, vector<8x1x1xf32>
    %3 = vector.broadcast %2 : vector<8x1x1xf32> to vector<8x16x16xf32>
    %4 = arith.mulf %1, %3 : vector<8x16x16xf32>
    %c0_6 = arith.constant 0 : index
    %c0_7 = arith.constant 0 : index
    %c0_8 = arith.constant 0 : index
    %5 = vector.load %arg3[%c0_6, %c0_7, %c0_8] : memref<8x1x1xf32, #tpu.memory_space<vmem>>, vector<8x1x1xf32>
    %6 = vector.broadcast %5 : vector<8x1x1xf32> to vector<8x16x16xf32>
    %7 = arith.addf %4, %6 : vector<8x16x16xf32>
    %cst = arith.constant 0.000000e+00 : f32
    %8 = vector.broadcast %cst : f32 to vector<8x16x16xf32>
    %9 = arith.maximumf %7, %8 : vector<8x16x16xf32>
    %10 = vector.shape_cast %9 : vector<8x16x16xf32> to vector<128x16xf32>
    %11 = arith.truncf %10 : vector<128x16xf32> to vector<128x16xbf16>
    %c0_9 = arith.constant 0 : index
    %c0_10 = arith.constant 0 : index
    %12 = vector.load %arg6[%c0_9, %c0_10] : memref<16x16xbf16, #tpu.memory_space<vmem>>, vector<16x16xbf16>
    %cst_11 = arith.constant dense<0.000000e+00> : vector<128x16xf32>
    %13 = tpu.matmul %11, %12, %cst_11 {dimension_numbers = #tpu.dot_dimension_numbers<[1], [0], [0], [1], [0, 0, 1, 1], [], []>} : vector<128x16xbf16>, vector<16x16xbf16>, vector<128x16xf32> -> vector<128x16xf32>
    %c0_12 = arith.constant 0 : index
    %c0_13 = arith.constant 0 : index
    %14 = vector.load %arg7[%c0_12, %c0_13] : memref<16x16xbf16, #tpu.memory_space<vmem>>, vector<16x16xbf16>
    %cst_14 = arith.constant dense<0.000000e+00> : vector<128x16xf32>
    %15 = tpu.matmul %11, %14, %cst_14 {dimension_numbers = #tpu.dot_dimension_numbers<[1], [0], [0], [1], [0, 0, 1, 1], [], []>} : vector<128x16xbf16>, vector<16x16xbf16>, vector<128x16xf32> -> vector<128x16xf32>
    %16 = vector.extract_strided_slice %13 {offsets = [0, 0], sizes = [64, 16], strides = [1, 1]} : vector<128x16xf32> to vector<64x16xf32>
    %17 = vector.extract_strided_slice %15 {offsets = [64, 0], sizes = [64, 16], strides = [1, 1]} : vector<128x16xf32> to vector<64x16xf32>
    %18 = arith.addf %16, %17 : vector<64x16xf32>
    %19 = vector.extract_strided_slice %13 {offsets = [64, 0], sizes = [64, 16], strides = [1, 1]} : vector<128x16xf32> to vector<64x16xf32>
    %20 = vector.extract_strided_slice %15 {offsets = [0, 0], sizes = [64, 16], strides = [1, 1]} : vector<128x16xf32> to vector<64x16xf32>
    %21 = arith.subf %19, %20 : vector<64x16xf32>
    %22 = tpu.concatenate %18, %21 in 0 : vector<64x16xf32>, vector<64x16xf32> -> vector<128x16xf32>
    %23 = vector.shape_cast %22 : vector<128x16xf32> to vector<8x16x16xf32>
    %24 = tpu.transpose %23, [0, 2, 1] : vector<8x16x16xf32> -> vector<8x16x16xf32>
    %25 = vector.shape_cast %24 : vector<8x16x16xf32> to vector<128x16xf32>
    %26 = arith.truncf %25 : vector<128x16xf32> to vector<128x16xbf16>
    %c0_15 = arith.constant 0 : index
    %c0_16 = arith.constant 0 : index
    %27 = vector.load %arg4[%c0_15, %c0_16] : memref<16x16xbf16, #tpu.memory_space<vmem>>, vector<16x16xbf16>
    %cst_17 = arith.constant dense<0.000000e+00> : vector<128x16xf32>
    %28 = tpu.matmul %26, %27, %cst_17 {dimension_numbers = #tpu.dot_dimension_numbers<[1], [0], [0], [1], [0, 0, 1, 1], [], []>} : vector<128x16xbf16>, vector<16x16xbf16>, vector<128x16xf32> -> vector<128x16xf32>
    %c0_18 = arith.constant 0 : index
    %c0_19 = arith.constant 0 : index
    %29 = vector.load %arg5[%c0_18, %c0_19] : memref<16x16xbf16, #tpu.memory_space<vmem>>, vector<16x16xbf16>
    %cst_20 = arith.constant dense<0.000000e+00> : vector<128x16xf32>
    %30 = tpu.matmul %26, %29, %cst_20 {dimension_numbers = #tpu.dot_dimension_numbers<[1], [0], [0], [1], [0, 0, 1, 1], [], []>} : vector<128x16xbf16>, vector<16x16xbf16>, vector<128x16xf32> -> vector<128x16xf32>
    %31 = vector.extract_strided_slice %28 {offsets = [0, 0], sizes = [64, 16], strides = [1, 1]} : vector<128x16xf32> to vector<64x16xf32>
    %32 = vector.extract_strided_slice %30 {offsets = [64, 0], sizes = [64, 16], strides = [1, 1]} : vector<128x16xf32> to vector<64x16xf32>
    %33 = arith.addf %31, %32 : vector<64x16xf32>
    %34 = vector.shape_cast %33 : vector<64x16xf32> to vector<1x4x16x16xf32>
    %c0_21 = arith.constant 0 : index
    %c0_22 = arith.constant 0 : index
    %c0_23 = arith.constant 0 : index
    %c0_24 = arith.constant 0 : index
    %35 = vector.load %arg8[%c0_21, %c0_22, %c0_23, %c0_24] : memref<1x4x16x16xf32, #tpu.memory_space<vmem>>, vector<1x4x16x16xf32>
    tpu.vector_store %arg8[%c0_21, %c0_22, %c0_23, %c0_24], %34 {strides = array<i32>} : memref<1x4x16x16xf32, #tpu.memory_space<vmem>>, vector<1x4x16x16xf32>,
    return
  }
  func.func @transform_0(%arg0: i32) -> (i32, i32, i32, i32) {
    %c0_i32 = arith.constant 0 : i32
    %c0_i32_0 = arith.constant 0 : i32
    %c0_i32_1 = arith.constant 0 : i32
    %c0_i32_2 = arith.constant 0 : i32
    return %arg0, %c0_i32, %c0_i32_0, %c0_i32_1 : i32, i32, i32, i32
  }
  func.func @transform_1(%arg0: i32) -> (i32, i32, i32) {
    %c0_i32 = arith.constant 0 : i32
    %c0_i32_0 = arith.constant 0 : i32
    %c0_i32_1 = arith.constant 0 : i32
    %c0_i32_2 = arith.constant 0 : i32
    return %c0_i32, %c0_i32_0, %c0_i32_1 : i32, i32, i32
  }
  func.func @transform_2(%arg0: i32) -> (i32, i32, i32) {
    %c0_i32 = arith.constant 0 : i32
    %c0_i32_0 = arith.constant 0 : i32
    %c0_i32_1 = arith.constant 0 : i32
    %c0_i32_2 = arith.constant 0 : i32
    return %c0_i32, %c0_i32_0, %c0_i32_1 : i32, i32, i32
  }
  func.func @transform_3(%arg0: i32) -> (i32, i32) {
    %c0_i32 = arith.constant 0 : i32
    %c0_i32_0 = arith.constant 0 : i32
    %c0_i32_1 = arith.constant 0 : i32
    return %c0_i32, %c0_i32_0 : i32, i32
  }
  func.func @transform_4(%arg0: i32) -> (i32, i32) {
    %c0_i32 = arith.constant 0 : i32
    %c0_i32_0 = arith.constant 0 : i32
    %c0_i32_1 = arith.constant 0 : i32
    return %c0_i32, %c0_i32_0 : i32, i32
  }
  func.func @transform_5(%arg0: i32) -> (i32, i32) {
    %c0_i32 = arith.constant 0 : i32
    %c0_i32_0 = arith.constant 0 : i32
    %c0_i32_1 = arith.constant 0 : i32
    return %c0_i32, %c0_i32_0 : i32, i32
  }
  func.func @transform_6(%arg0: i32) -> (i32, i32) {
    %c0_i32 = arith.constant 0 : i32
    %c0_i32_0 = arith.constant 0 : i32
    %c0_i32_1 = arith.constant 0 : i32
    return %c0_i32, %c0_i32_0 : i32, i32
  }
  func.func @transform_7(%arg0: i32) -> (i32, i32, i32, i32) {
    %c0_i32 = arith.constant 0 : i32
    %c0_i32_0 = arith.constant 0 : i32
    %c0_i32_1 = arith.constant 0 : i32
    %c0_i32_2 = arith.constant 0 : i32
    return %arg0, %c0_i32, %c0_i32_0, %c0_i32_1 : i32, i32, i32, i32
  }
}

</mosaic_0001>

<llo_original>
// kernel: fourier_unit.4
$region0: #{fourier_unit.4}
  #allocation0 [shape = 'u32[]', space=smem, size = 0x4, offset = 0x4, fixed_abs, tag = 'smem constant byte address 0x4 - core index']
  #allocation1 [shape = 'u32[144,128]{1,0:T(1,128)}', space=vmem, size = 0x12000, scoped, tag = 'internal scratch']
  %s0 = inlined_call_operand.vmem [shape: f32[2,8,256], index: 0, kind: input, shape index: {}]
  %s1 = inlined_call_operand.vmem [shape: f32[8,8], index: 1, kind: input, shape index: {}]
  %s2 = inlined_call_operand.vmem [shape: f32[2,8,256], index: 2, kind: output, shape index: {0}]
  %s3 = inlined_call_operand.vmem [shape: f32[2,8,1], index: 3, kind: output, shape index: {1}]
  %s4 = inlined_call_operand.vmem [shape: f32[2,8,1], index: 4, kind: output, shape index: {2}]
  %5 = xla_tuple %s2, %s3, %s4
  %s6 = sld [smem:[#allocation0]]
  $region57: #{fourier_unit.4} parent=0
    _
  %s8 = ssub.s32 1, %s6
  %s9 = scalar_select 0, %s8, %s6
  loop: start=0, step=1, limit=4
  $region2: #{fourier_unit.4} parent=0 // loop_pre_header
    _
  $region3: #{fourier_unit.4} parent=0 // loop_header
    %s11 = sphi 0, %s15
    %p12 = scmp.ge.s32.totalorder %s11, 4
    %s21 = sphi 0, %s23
    %s24 = sphi 0, %s21
    %s25 = sphi 0, %s24
    %s41 = sphi 0, %s25
    %s45 = sphi 0, %s45
    %s47 = sphi 0, %s45
    %s48 = sphi 0, %s47
    %s62 = sphi 0, %s48
    %s68 = sphi 0, %s70
    %s71 = sphi 0, %s68
    %s72 = sphi 0, %s71
    %s88 = sphi 0, %s72
    %s94 = sphi 0, %s96
    %s97 = sphi 0, %s94
    %s98 = sphi 0, %s97
    %s114 = sphi 0, %s98
    %s120 = sphi 0, %s122
    %s123 = sphi 0, %s120
    %s124 = sphi 0, %s123
    %s140 = sphi 0, %s124
  $region4: #{fourier_unit.4} parent=0 // loop_header_branch
    %14 = sbr.rel (%p12) target = $region8
  $region5: #{fourier_unit.4} parent=0 // loop_body
    %s16 = ssub.s32 %s11, 1
    %s17 = ssub.s32 %s11, 2
    %s18 = sadd.s32 %s11, 1
    %s19 = ssub.s32 %s11, %s18
    %p20 = scmp.eq.s32.totalorder %s19, 0
    %s22 = sadd.s32 %s21, 1
    %s23 = scalar_select %p20, %s21, %s22
    %p26 = pneg %p20
    %p27 = scmp.eq.s32.totalorder %s11, 1
    %p28 = por %p26, %p27
    %p29 = scmp.ne.s32.totalorder %s21, %s24
    %p30 = scmp.eq.s32.totalorder %s11, 0
    %p31 = por %p29, %p30
    %p32 = scmp.ne.s32.totalorder %s21, %s24
    %p33 = scmp.eq.s32.totalorder %s16, 1
    %p34 = por %p32, %p33
    %p35 = scmp.ne.s32.totalorder %s24, %s25
    %p36 = scmp.eq.s32.totalorder %s16, 0
    %p37 = por %p35, %p36
    %p38 = scmp.ne.s32.totalorder %s24, %s25
    %p39 = scmp.eq.s32.totalorder %s17, 1
    %p40 = por %p38, %p39
    %p42 = scmp.ne.s32.totalorder %s25, %s41
    %p43 = scmp.eq.s32.totalorder %s17, 0
    %p44 = por %p42, %p43
    %s46 = sadd.s32 %s45, 1
    %p49 = scmp.eq.s32.totalorder %s11, 1
    %p50 = scmp.ne.s32.totalorder %s45, %s47
    %p51 = scmp.eq.s32.totalorder %s11, 0
    %p52 = por %p50, %p51
    %p53 = scmp.ne.s32.totalorder %s45, %s47
    %p54 = scmp.eq.s32.totalorder %s16, 1
    %p55 = por %p53, %p54
    %p56 = scmp.ne.s32.totalorder %s47, %s48
    %p57 = scmp.eq.s32.totalorder %s16, 0
    %p58 = por %p56, %p57
    %p59 = scmp.ne.s32.totalorder %s47, %s48
    %p60 = scmp.eq.s32.totalorder %s17, 1
    %p61 = por %p59, %p60
    %p63 = scmp.ne.s32.totalorder %s48, %s62
    %p64 = scmp.eq.s32.totalorder %s17, 0
    %p65 = por %p63, %p64
    %s66 = ssub.s32 %s11, %s18
    %p67 = scmp.eq.s32.totalorder %s66, 0
    %s69 = sadd.s32 %s68, 1
    %s70 = scalar_select %p67, %s68, %s69
    %p73 = pneg %p67
    %p74 = scmp.eq.s32.totalorder %s11, 1
    %p75 = por %p73, %p74
    %p76 = scmp.ne.s32.totalorder %s68, %s71
    %p77 = scmp.eq.s32.totalorder %s11, 0
    %p78 = por %p76, %p77
    %p79 = scmp.ne.s32.totalorder %s68, %s71
    %p80 = scmp.eq.s32.totalorder %s16, 1
    %p81 = por %p79, %p80
    %p82 = scmp.ne.s32.totalorder %s71, %s72
    %p83 = scmp.eq.s32.totalorder %s16, 0
    %p84 = por %p82, %p83
    %p85 = scmp.ne.s32.totalorder %s71, %s72
    %p86 = scmp.eq.s32.totalorder %s17, 1
    %p87 = por %p85, %p86
    %p89 = scmp.ne.s32.totalorder %s72, %s88
    %p90 = scmp.eq.s32.totalorder %s17, 0
    %p91 = por %p89, %p90
    %s92 = ssub.s32 %s11, %s18
    %p93 = scmp.eq.s32.totalorder %s92, 0
    %s95 = sadd.s32 %s94, 1
    %s96 = scalar_select %p93, %s94, %s95
    %p99 = pneg %p93
    %p100 = scmp.eq.s32.totalorder %s11, 1
    %p101 = por %p99, %p100
    %p102 = scmp.ne.s32.totalorder %s94, %s97
    %p103 = scmp.eq.s32.totalorder %s11, 0
    %p104 = por %p102, %p103
    %p105 = scmp.ne.s32.totalorder %s94, %s97
    %p106 = scmp.eq.s32.totalorder %s16, 1
    %p107 = por %p105, %p106
    %p108 = scmp.ne.s32.totalorder %s97, %s98
    %p109 = scmp.eq.s32.totalorder %s16, 0
    %p110 = por %p108, %p109
    %p111 = scmp.ne.s32.totalorder %s97, %s98
    %p112 = scmp.eq.s32.totalorder %s17, 1
    %p113 = por %p111, %p112
    %p115 = scmp.ne.s32.totalorder %s98, %s114
    %p116 = scmp.eq.s32.totalorder %s17, 0
    %p117 = por %p115, %p116
    %s118 = ssub.s32 %s11, %s18
    %p119 = scmp.eq.s32.totalorder %s118, 0
    %s121 = sadd.s32 %s120, 1
    %s122 = scalar_select %p119, %s120, %s121
    %p125 = pneg %p119
    %p126 = scmp.eq.s32.totalorder %s11, 1
    %p127 = por %p125, %p126
    %p128 = scmp.ne.s32.totalorder %s120, %s123
    %p129 = scmp.eq.s32.totalorder %s11, 0
    %p130 = por %p128, %p129
    %p131 = scmp.ne.s32.totalorder %s120, %s123
    %p132 = scmp.eq.s32.totalorder %s16, 1
    %p133 = por %p131, %p132
    %p134 = scmp.ne.s32.totalorder %s123, %s124
    %p135 = scmp.eq.s32.totalorder %s16, 0
    %p136 = por %p134, %p135
    %p137 = scmp.ne.s32.totalorder %s123, %s124
    %p138 = scmp.eq.s32.totalorder %s17, 1
    %p139 = por %p137, %p138
    %p141 = scmp.ne.s32.totalorder %s124, %s140
    %p142 = scmp.eq.s32.totalorder %s17, 0
    %p143 = por %p141, %p142
    %p144 = scmp.le.s32.totalorder 1, %s11
    %p145 = scmp.lt.s32.totalorder %s11, 3
    %p146 = pnand %p144, %p145
    %p147 = pneg %p146
    // Predicated region
    $region9: #{fourier_unit.4} parent=5 // pred_check
      _
    $region10: #{fourier_unit.4} parent=5 // pred_check_branch
      %149 = sbr.rel (%p146) target = $region12
    $region11: #{fourier_unit.4} parent=5 // pred_region
      %s150 = ssub.s32 %s11, 1
      // Predicated region
      $region13: #{fourier_unit.4} parent=11 // pred_check
        %p151 = pneg %p58
      $region14: #{fourier_unit.4} parent=11 // pred_check_branch
        %153 = sbr.rel (%p151) target = $region16
      $region15: #{fourier_unit.4} parent=11 // pred_region
        _
      $region16: #{fourier_unit.4} parent=11 // pred_fallthru
        _
    $region12: #{fourier_unit.4} parent=5 // pred_fallthru
      _
    %p154 = scmp.lt.s32.totalorder %s11, 2
    // Predicated region
    $region17: #{fourier_unit.4} parent=5 // pred_check
      %p155 = pneg %p154
    $region18: #{fourier_unit.4} parent=5 // pred_check_branch
      %157 = sbr.rel (%p155) target = $region20
    $region19: #{fourier_unit.4} parent=5 // pred_region
      // Predicated region
      $region21: #{fourier_unit.4} parent=19 // pred_check
        %p158 = pneg %p31
      $region22: #{fourier_unit.4} parent=19 // pred_check_branch
        %160 = sbr.rel (%p158) target = $region24
      $region23: #{fourier_unit.4} parent=19 // pred_region
        %p161 = scmp.lt.s32.totalorder %s11, 1
        %s162 = scalar_select %p161, %s11, 1
        %s163 = smul.addr %s162, 2
        %s164 = smul.addr %s163, 8
        %s165 = scalar_lea.vmem %s0, %s164
      $region24: #{fourier_unit.4} parent=19 // pred_fallthru
        _
    $region20: #{fourier_unit.4} parent=5 // pred_fallthru
      _
    %p166 = scmp.le.s32.totalorder 1, %s11
    %p167 = scmp.lt.s32.totalorder %s11, 3
    %p168 = pnand %p166, %p167
    %p169 = pneg %p168
    // Predicated region
    $region25: #{fourier_unit.4} parent=5 // pred_check
      _
    $region26: #{fourier_unit.4} parent=5 // pred_check_branch
      %171 = sbr.rel (%p168) target = $region28
    $region27: #{fourier_unit.4} parent=5 // pred_region
      %s172 = ssub.s32 %s11, 1
      %p173 = scmp.lt.s32.totalorder %s16, 1
      %s174 = scalar_select %p173, %s16, 1
      %s175 = smul.addr %s174, 2
      %s176 = smul.addr %s175, 8
      %s177 = scalar_lea.vmem %s0, %s176
      %p178 = pneg %p37
      %p179 = pneg %p34
      %p180 = pneg %p58
      %p181 = pneg %p55
      %p182 = pneg %p84
      %p183 = pneg %p81
      %p184 = scmp.lt.s32.totalorder %s16, 1
      %s185 = scalar_select %p184, %s16, 1
      %s186 = smul.addr %s185, 2
      %s187 = smul.addr %s186, 8
      %s188 = scalar_lea.vmem %s2, %s187
      %p189 = pneg %p110
      %p190 = pneg %p107
      %p191 = scmp.lt.s32.totalorder %s16, 1
      %s192 = scalar_select %p191, %s16, 1
      %s193 = smul.addr %s192, 8
      %s194 = scalar_lea.vmem %s3, %s193
      %p195 = pneg %p136
      %p196 = pneg %p133
      %p197 = scmp.lt.s32.totalorder %s16, 1
      %s198 = scalar_select %p197, %s16, 1
      %s199 = smul.addr %s198, 8
      %s200 = scalar_lea.vmem %s4, %s199
      %p201 = scmp.lt.s32.totalorder %s16, 1
      %s202 = scalar_select %p201, %s16, 1
      %s203 = smul.addr %s202, 2
      %s204 = smul.addr %s203, 8
      %s205 = scalar_lea.vmem %s0, %s204
      %p206 = scmp.lt.s32.totalorder %s16, 1
      %s207 = scalar_select %p206, %s16, 1
      %s208 = smul.addr %s207, 2
      %s209 = smul.addr %s208, 8
      %s210 = scalar_lea.vmem %s2, %s209
      %p211 = scmp.lt.s32.totalorder %s16, 1
      %s212 = scalar_select %p211, %s16, 1
      %s213 = smul.addr %s212, 8
      %s214 = scalar_lea.vmem %s3, %s213
      %p215 = scmp.lt.s32.totalorder %s16, 1
      %s216 = scalar_select %p215, %s16, 1
      %s217 = smul.addr %s216, 8
      %s218 = scalar_lea.vmem %s4, %s217
      %v219 = vld [vmem:[%s205] sm:$0xff]
      %v220 = vld [vmem:[%s205 + $0x8] sm:$0xff]
      %v221 = vld [vmem:[%s1] sm:$0xff]
      %vm222 = vcmask 64512
      %v224 = vsel %vm222, %v221, 0
      %226 = vmatprep.subr.mxu0 %v220
      %227 = vmatpush1.msra.mxu0 %v219
      %228 = vmatprep.subr.mxu0 0.0
      %229 = vmatpush1.msra.mxu0 0.0
      %230 = vmatprep.subr.mxu0 0.0
      %231 = vmatpush1.msra.mxu0 0.0
      %232 = vmatprep.subr.mxu0 0.0
      %233 = vmatpush1.msra.mxu0 0.0
      %234 = vmatprep.subr.mxu0 0.0
      %235 = vmatpush1.msra.mxu0 0.0
      %236 = vmatprep.subr.mxu0 0.0
      %237 = vmatpush1.msra.mxu0 0.0
      %238 = vmatprep.subr.mxu0 0.0
      %239 = vmatpush1.msra.mxu0 0.0
      %240 = vmatprep.subr.mxu0 0.0
      %241 = vmatpush1.msra.mxu0 0.0
      %242 = vmatprep.subr.mxu0 0.0
      %243 = vmatpush1.msra.mxu0 0.0
      %244 = vmatprep.subr.mxu0 0.0
      %245 = vmatpush1.msra.mxu0 0.0
      %246 = vmatprep.subr.mxu0 0.0
      %247 = vmatpush1.msra.mxu0 0.0
      %248 = vmatprep.subr.mxu0 0.0
      %249 = vmatpush1.msra.mxu0 0.0
      %250 = vmatprep.subr.mxu0 0.0
      %251 = vmatpush1.msra.mxu0 0.0
      %252 = vmatprep.subr.mxu0 0.0
      %253 = vmatpush1.msra.mxu0 0.0
      %254 = vmatprep.subr.mxu0 0.0
      %255 = vmatpush1.msra.mxu0 0.0
      %256 = vmatprep.subr.mxu0 0.0
      %257 = vmatpush1.msra.mxu0 0.0
      %258 = vmatprep.subr.mxu0 0.0
      %259 = vmatpush1.msra.mxu0 0.0
      %260 = vmatprep.subr.mxu0 0.0
      %261 = vmatpush1.msra.mxu0 0.0
      %262 = vmatprep.subr.mxu0 0.0
      %263 = vmatpush1.msra.mxu0 0.0
      %264 = vmatprep.subr.mxu0 0.0
      %265 = vmatpush1.msra.mxu0 0.0
      %266 = vmatprep.subr.mxu0 0.0
      %267 = vmatpush1.msra.mxu0 0.0
      %268 = vmatprep.subr.mxu0 0.0
      %269 = vmatpush1.msra.mxu0 0.0
      %270 = vmatprep.subr.mxu0 0.0
      %271 = vmatpush1.msra.mxu0 0.0
      %272 = vmatprep.subr.mxu0 0.0
      %273 = vmatpush1.msra.mxu0 0.0
      %274 = vmatprep.subr.mxu0 0.0
      %275 = vmatpush1.msra.mxu0 0.0
      %276 = vmatprep.subr.mxu0 0.0
      %277 = vmatpush1.msra.mxu0 0.0
      %278 = vmatprep.subr.mxu0 0.0
      %279 = vmatpush1.msra.mxu0 0.0
      %280 = vmatprep.subr.mxu0 0.0
      %281 = vmatpush1.msra.mxu0 0.0
      %282 = vmatprep.subr.mxu0 0.0
      %283 = vmatpush1.msra.mxu0 0.0
      %284 = vmatprep.subr.mxu0 0.0
      %285 = vmatpush1.msra.mxu0 0.0
      %286 = vmatprep.subr.mxu0 0.0
      %287 = vmatpush1.msra.mxu0 0.0
      %288 = vmatprep.subr.mxu0 0.0
      %289 = vmatpush1.msra.mxu0 0.0
      %290 = vmatprep.mubr.f32.mxu0 0.0
      %291 = vmatmul.mubr.f32.gmra.mrb[0].mxu0 %v224
      %v292 = vpop.f32.mrb[0].mxu0
      %v293 = vadd.f32 0.0, %v292
      %v294 = vpop.f32.mrb[0].mxu0
      %v295 = vadd.f32 0.0, %v294
      %296 = vdwg.mxu0
      %297 = vst [vmem:[%s210] sm:$0xff] %v293
      %298 = vst [vmem:[%s210 + $0x8] sm:$0xff] %v295
      %v299 = vadd.f32 %v293, %v295
      %300 = vadd.xlane.f32.xlu0 %v299
      %v301 = vpop.xlane.xlu0 %300
      %vm302 = vcmask 7168
      %303 = vst.msk [vmem:[%s214] sm:$0xff] %vm302, %v301
      %v304 = vmul.f32 %v293, %v293
      %v305 = vmul.f32 %v295, %v295
      %v306 = vadd.f32 %v304, %v305
      %307 = vadd.xlane.f32.xlu0 %v306
      %v308 = vpop.xlane.xlu0 %307
      %309 = vst.msk [vmem:[%s218] sm:$0xff] %vm302, %v308
      %p310 = scmp.lt.s32.totalorder %s16, 1
      %s311 = scalar_select %p310, %s16, 1
      %s312 = smul.addr %s311, 2
      %s313 = smul.addr %s312, 8
      %s314 = scalar_lea.vmem %s2, %s313
      %p315 = scmp.lt.s32.totalorder %s16, 1
      %s316 = scalar_select %p315, %s16, 1
      %s317 = smul.addr %s316, 8
      %s318 = scalar_lea.vmem %s3, %s317
      %p319 = scmp.lt.s32.totalorder %s16, 1
      %s320 = scalar_select %p319, %s16, 1
      %s321 = smul.addr %s320, 8
      %s322 = scalar_lea.vmem %s4, %s321
      // Predicated region
      $region29: #{fourier_unit.4} parent=27 // pred_check
        %p323 = pneg %p81
      $region30: #{fourier_unit.4} parent=27 // pred_check_branch
        %325 = sbr.rel (%p323) target = $region32
      $region31: #{fourier_unit.4} parent=27 // pred_region
        _
      $region32: #{fourier_unit.4} parent=27 // pred_fallthru
        _
      // Predicated region
      $region33: #{fourier_unit.4} parent=27 // pred_check
        %p326 = pneg %p107
      $region34: #{fourier_unit.4} parent=27 // pred_check_branch
        %328 = sbr.rel (%p326) target = $region36
      $region35: #{fourier_unit.4} parent=27 // pred_region
        _
      $region36: #{fourier_unit.4} parent=27 // pred_fallthru
        _
      // Predicated region
      $region37: #{fourier_unit.4} parent=27 // pred_check
        %p329 = pneg %p133
      $region38: #{fourier_unit.4} parent=27 // pred_check_branch
        %331 = sbr.rel (%p329) target = $region40
      $region39: #{fourier_unit.4} parent=27 // pred_region
        _
      $region40: #{fourier_unit.4} parent=27 // pred_fallthru
        _
    $region28: #{fourier_unit.4} parent=5 // pred_fallthru
      _
    %p332 = scmp.le.s32.totalorder 2, %s11
    // Predicated region
    $region41: #{fourier_unit.4} parent=5 // pred_check
      %p333 = pneg %p332
    $region42: #{fourier_unit.4} parent=5 // pred_check_branch
      %335 = sbr.rel (%p333) target = $region44
    $region43: #{fourier_unit.4} parent=5 // pred_region
      %s336 = ssub.s32 %s11, 2
      // Predicated region
      $region45: #{fourier_unit.4} parent=43 // pred_check
        %p337 = pneg %p87
      $region46: #{fourier_unit.4} parent=43 // pred_check_branch
        %339 = sbr.rel (%p337) target = $region48
      $region47: #{fourier_unit.4} parent=43 // pred_region
        %p340 = scmp.lt.s32.totalorder %s17, 1
        %s341 = scalar_select %p340, %s17, 1
        %s342 = smul.addr %s341, 2
        %s343 = smul.addr %s342, 8
        %s344 = scalar_lea.vmem %s2, %s343
      $region48: #{fourier_unit.4} parent=43 // pred_fallthru
        _
      // Predicated region
      $region49: #{fourier_unit.4} parent=43 // pred_check
        %p345 = pneg %p113
      $region50: #{fourier_unit.4} parent=43 // pred_check_branch
        %347 = sbr.rel (%p345) target = $region52
      $region51: #{fourier_unit.4} parent=43 // pred_region
        %p348 = scmp.lt.s32.totalorder %s17, 1
        %s349 = scalar_select %p348, %s17, 1
        %s350 = smul.addr %s349, 8
        %s351 = scalar_lea.vmem %s3, %s350
      $region52: #{fourier_unit.4} parent=43 // pred_fallthru
        _
      // Predicated region
      $region53: #{fourier_unit.4} parent=43 // pred_check
        %p352 = pneg %p139
      $region54: #{fourier_unit.4} parent=43 // pred_check_branch
        %354 = sbr.rel (%p352) target = $region56
      $region55: #{fourier_unit.4} parent=43 // pred_region
        %p355 = scmp.lt.s32.totalorder %s17, 1
        %s356 = scalar_select %p355, %s17, 1
        %s357 = smul.addr %s356, 8
        %s358 = scalar_lea.vmem %s4, %s357
      $region56: #{fourier_unit.4} parent=43 // pred_fallthru
        _
    $region44: #{fourier_unit.4} parent=5 // pred_fallthru
      _
  $region6: #{fourier_unit.4} parent=0 // loop_footer
    %s15 = sadd.s32 1, %s11
  $region7: #{fourier_unit.4} parent=0 // loop_footer_branch
    %10 = sbr.rel target = $region3
  $region8: #{fourier_unit.4} parent=0 // loop_exit
    _

// kernel: fourier_unit.3
$region0: #{fourier_unit.3}
  #allocation0 [shape = 'u32[]', space=smem, size = 0x4, offset = 0x4, fixed_abs, tag = 'smem constant byte address 0x4 - core index']
  #allocation1 [shape = 'u32[144,128]{1,0:T(1,128)}', space=vmem, size = 0x12000, scoped, tag = 'internal scratch']
  %s0 = inlined_call_operand.vmem [shape: bf16[2,4,16,16], index: 0, kind: input, shape index: {}]
  %s1 = inlined_call_operand.vmem [shape: bf16[16,16], index: 1, kind: input, shape index: {}, may-alias: {1,3}]
  %s2 = inlined_call_operand.vmem [shape: bf16[16,16], index: 2, kind: input, shape index: {}, may-alias: {2,4}]
  %s3 = inlined_call_operand.vmem [shape: bf16[16,16], index: 3, kind: input, shape index: {}, may-alias: {1,3}]
  %s4 = inlined_call_operand.vmem [shape: bf16[16,16], index: 4, kind: input, shape index: {}, may-alias: {2,4}]
  %s5 = inlined_call_operand.vmem [shape: f32[2,8,16,16], index: 5, kind: output, shape index: {}]
  %s6 = sld [smem:[#allocation0]]
  $region53: #{fourier_unit.3} parent=0
    _
  %s8 = ssub.s32 1, %s6
  %s9 = scalar_select 0, %s8, %s6
  loop: start=0, step=1, limit=4
  $region2: #{fourier_unit.3} parent=0 // loop_pre_header
    _
  $region3: #{fourier_unit.3} parent=0 // loop_header
    %s11 = sphi 0, %s15
    %p12 = scmp.ge.s32.totalorder %s11, 4
    %s21 = sphi 0, %s23
    %s24 = sphi 0, %s21
    %s25 = sphi 0, %s24
    %s41 = sphi 0, %s25
    %s45 = sphi 0, %s45
    %s47 = sphi 0, %s45
    %s48 = sphi 0, %s47
    %s62 = sphi 0, %s48
    %s66 = sphi 0, %s66
    %s68 = sphi 0, %s66
    %s69 = sphi 0, %s68
    %s83 = sphi 0, %s69
    %s87 = sphi 0, %s87
    %s89 = sphi 0, %s87
    %s90 = sphi 0, %s89
    %s104 = sphi 0, %s90
    %s108 = sphi 0, %s108
    %s110 = sphi 0, %s108
    %s111 = sphi 0, %s110
    %s125 = sphi 0, %s111
    %s131 = sphi 0, %s133
    %s134 = sphi 0, %s131
    %s135 = sphi 0, %s134
    %s151 = sphi 0, %s135
  $region4: #{fourier_unit.3} parent=0 // loop_header_branch
    %14 = sbr.rel (%p12) target = $region8
  $region5: #{fourier_unit.3} parent=0 // loop_body
    %s16 = ssub.s32 %s11, 1
    %s17 = ssub.s32 %s11, 2
    %s18 = sadd.s32 %s11, 1
    %s19 = ssub.s32 %s11, %s18
    %p20 = scmp.eq.s32.totalorder %s19, 0
    %s22 = sadd.s32 %s21, 1
    %s23 = scalar_select %p20, %s21, %s22
    %p26 = pneg %p20
    %p27 = scmp.eq.s32.totalorder %s11, 1
    %p28 = por %p26, %p27
    %p29 = scmp.ne.s32.totalorder %s21, %s24
    %p30 = scmp.eq.s32.totalorder %s11, 0
    %p31 = por %p29, %p30
    %p32 = scmp.ne.s32.totalorder %s21, %s24
    %p33 = scmp.eq.s32.totalorder %s16, 1
    %p34 = por %p32, %p33
    %p35 = scmp.ne.s32.totalorder %s24, %s25
    %p36 = scmp.eq.s32.totalorder %s16, 0
    %p37 = por %p35, %p36
    %p38 = scmp.ne.s32.totalorder %s24, %s25
    %p39 = scmp.eq.s32.totalorder %s17, 1
    %p40 = por %p38, %p39
    %p42 = scmp.ne.s32.totalorder %s25, %s41
    %p43 = scmp.eq.s32.totalorder %s17, 0
    %p44 = por %p42, %p43
    %s46 = sadd.s32 %s45, 1
    %p49 = scmp.eq.s32.totalorder %s11, 1
    %p50 = scmp.ne.s32.totalorder %s45, %s47
    %p51 = scmp.eq.s32.totalorder %s11, 0
    %p52 = por %p50, %p51
    %p53 = scmp.ne.s32.totalorder %s45, %s47
    %p54 = scmp.eq.s32.totalorder %s16, 1
    %p55 = por %p53, %p54
    %p56 = scmp.ne.s32.totalorder %s47, %s48
    %p57 = scmp.eq.s32.totalorder %s16, 0
    %p58 = por %p56, %p57
    %p59 = scmp.ne.s32.totalorder %s47, %s48
    %p60 = scmp.eq.s32.totalorder %s17, 1
    %p61 = por %p59, %p60
    %p63 = scmp.ne.s32.totalorder %s48, %s62
    %p64 = scmp.eq.s32.totalorder %s17, 0
    %p65 = por %p63, %p64
    %s67 = sadd.s32 %s66, 1
    %p70 = scmp.eq.s32.totalorder %s11, 1
    %p71 = scmp.ne.s32.totalorder %s66, %s68
    %p72 = scmp.eq.s32.totalorder %s11, 0
    %p73 = por %p71, %p72
    %p74 = scmp.ne.s32.totalorder %s66, %s68
    %p75 = scmp.eq.s32.totalorder %s16, 1
    %p76 = por %p74, %p75
    %p77 = scmp.ne.s32.totalorder %s68, %s69
    %p78 = scmp.eq.s32.totalorder %s16, 0
    %p79 = por %p77, %p78
    %p80 = scmp.ne.s32.totalorder %s68, %s69
    %p81 = scmp.eq.s32.totalorder %s17, 1
    %p82 = por %p80, %p81
    %p84 = scmp.ne.s32.totalorder %s69, %s83
    %p85 = scmp.eq.s32.totalorder %s17, 0
    %p86 = por %p84, %p85
    %s88 = sadd.s32 %s87, 1
    %p91 = scmp.eq.s32.totalorder %s11, 1
    %p92 = scmp.ne.s32.totalorder %s87, %s89
    %p93 = scmp.eq.s32.totalorder %s11, 0
    %p94 = por %p92, %p93
    %p95 = scmp.ne.s32.totalorder %s87, %s89
    %p96 = scmp.eq.s32.totalorder %s16, 1
    %p97 = por %p95, %p96
    %p98 = scmp.ne.s32.totalorder %s89, %s90
    %p99 = scmp.eq.s32.totalorder %s16, 0
    %p100 = por %p98, %p99
    %p101 = scmp.ne.s32.totalorder %s89, %s90
    %p102 = scmp.eq.s32.totalorder %s17, 1
    %p103 = por %p101, %p102
    %p105 = scmp.ne.s32.totalorder %s90, %s104
    %p106 = scmp.eq.s32.totalorder %s17, 0
    %p107 = por %p105, %p106
    %s109 = sadd.s32 %s108, 1
    %p112 = scmp.eq.s32.totalorder %s11, 1
    %p113 = scmp.ne.s32.totalorder %s108, %s110
    %p114 = scmp.eq.s32.totalorder %s11, 0
    %p115 = por %p113, %p114
    %p116 = scmp.ne.s32.totalorder %s108, %s110
    %p117 = scmp.eq.s32.totalorder %s16, 1
    %p118 = por %p116, %p117
    %p119 = scmp.ne.s32.totalorder %s110, %s111
    %p120 = scmp.eq.s32.totalorder %s16, 0
    %p121 = por %p119, %p120
    %p122 = scmp.ne.s32.totalorder %s110, %s111
    %p123 = scmp.eq.s32.totalorder %s17, 1
    %p124 = por %p122, %p123
    %p126 = scmp.ne.s32.totalorder %s111, %s125
    %p127 = scmp.eq.s32.totalorder %s17, 0
    %p128 = por %p126, %p127
    %s129 = ssub.s32 %s11, %s18
    %p130 = scmp.eq.s32.totalorder %s129, 0
    %s132 = sadd.s32 %s131, 1
    %s133 = scalar_select %p130, %s131, %s132
    %p136 = pneg %p130
    %p137 = scmp.eq.s32.totalorder %s11, 1
    %p138 = por %p136, %p137
    %p139 = scmp.ne.s32.totalorder %s131, %s134
    %p140 = scmp.eq.s32.totalorder %s11, 0
    %p141 = por %p139, %p140
    %p142 = scmp.ne.s32.totalorder %s131, %s134
    %p143 = scmp.eq.s32.totalorder %s16, 1
    %p144 = por %p142, %p143
    %p145 = scmp.ne.s32.totalorder %s134, %s135
    %p146 = scmp.eq.s32.totalorder %s16, 0
    %p147 = por %p145, %p146
    %p148 = scmp.ne.s32.totalorder %s134, %s135
    %p149 = scmp.eq.s32.totalorder %s17, 1
    %p150 = por %p148, %p149
    %p152 = scmp.ne.s32.totalorder %s135, %s151
    %p153 = scmp.eq.s32.totalorder %s17, 0
    %p154 = por %p152, %p153
    %p155 = scmp.le.s32.totalorder 1, %s11
    %p156 = scmp.lt.s32.totalorder %s11, 3
    %p157 = pnand %p155, %p156
    %p158 = pneg %p157
    // Predicated region
    $region9: #{fourier_unit.3} parent=5 // pred_check
      _
    $region10: #{fourier_unit.3} parent=5 // pred_check_branch
      %160 = sbr.rel (%p157) target = $region12
    $region11: #{fourier_unit.3} parent=5 // pred_region
      %s161 = ssub.s32 %s11, 1
      // Predicated region
      $region13: #{fourier_unit.3} parent=11 // pred_check
        %p162 = pneg %p58
      $region14: #{fourier_unit.3} parent=11 // pred_check_branch
        %164 = sbr.rel (%p162) target = $region16
      $region15: #{fourier_unit.3} parent=11 // pred_region
        _
      $region16: #{fourier_unit.3} parent=11 // pred_fallthru
        _
      // Predicated region
      $region17: #{fourier_unit.3} parent=11 // pred_check
        %p165 = pneg %p79
      $region18: #{fourier_unit.3} parent=11 // pred_check_branch
        %167 = sbr.rel (%p165) target = $region20
      $region19: #{fourier_unit.3} parent=11 // pred_region
        _
      $region20: #{fourier_unit.3} parent=11 // pred_fallthru
        _
      // Predicated region
      $region21: #{fourier_unit.3} parent=11 // pred_check
        %p168 = pneg %p100
      $region22: #{fourier_unit.3} parent=11 // pred_check_branch
        %170 = sbr.rel (%p168) target = $region24
      $region23: #{fourier_unit.3} parent=11 // pred_region
        _
      $region24: #{fourier_unit.3} parent=11 // pred_fallthru
        _
      // Predicated region
      $region25: #{fourier_unit.3} parent=11 // pred_check
        %p171 = pneg %p121
      $region26: #{fourier_unit.3} parent=11 // pred_check_branch
        %173 = sbr.rel (%p171) target = $region28
      $region27: #{fourier_unit.3} parent=11 // pred_region
        _
      $region28: #{fourier_unit.3} parent=11 // pred_fallthru
        _
    $region12: #{fourier_unit.3} parent=5 // pred_fallthru
      _
    %p174 = scmp.lt.s32.totalorder %s11, 2
    // Predicated region
    $region29: #{fourier_unit.3} parent=5 // pred_check
      %p175 = pneg %p174
    $region30: #{fourier_unit.3} parent=5 // pred_check_branch
      %177 = sbr.rel (%p175) target = $region32
    $region31: #{fourier_unit.3} parent=5 // pred_region
      // Predicated region
      $region33: #{fourier_unit.3} parent=31 // pred_check
        %p178 = pneg %p31
      $region34: #{fourier_unit.3} parent=31 // pred_check_branch
        %180 = sbr.rel (%p178) target = $region36
      $region35: #{fourier_unit.3} parent=31 // pred_region
        %p181 = scmp.lt.s32.totalorder %s11, 1
        %s182 = scalar_select %p181, %s11, 1
        %s183 = smul.addr %s182, 8
        %s184 = smul.addr %s183, 4
        %s185 = scalar_lea.vmem %s0, %s184
      $region36: #{fourier_unit.3} parent=31 // pred_fallthru
        _
    $region32: #{fourier_unit.3} parent=5 // pred_fallthru
      _
    %p186 = scmp.le.s32.totalorder 1, %s11
    %p187 = scmp.lt.s32.totalorder %s11, 3
    %p188 = pnand %p186, %p187
    %p189 = pneg %p188
    // Predicated region
    $region37: #{fourier_unit.3} parent=5 // pred_check
      _
    $region38: #{fourier_unit.3} parent=5 // pred_check_branch
      %191 = sbr.rel (%p188) target = $region40
    $region39: #{fourier_unit.3} parent=5 // pred_region
      %s192 = ssub.s32 %s11, 1
      %p193 = scmp.lt.s32.totalorder %s16, 1
      %s194 = scalar_select %p193, %s16, 1
      %s195 = smul.addr %s194, 8
      %s196 = smul.addr %s195, 4
      %s197 = scalar_lea.vmem %s0, %s196
      %p198 = pneg %p37
      %p199 = pneg %p34
      %p200 = pneg %p58
      %p201 = pneg %p55
      %p202 = pneg %p79
      %p203 = pneg %p76
      %p204 = pneg %p100
      %p205 = pneg %p97
      %p206 = pneg %p121
      %p207 = pneg %p118
      %p208 = pneg %p147
      %p209 = pneg %p144
      %p210 = scmp.lt.s32.totalorder %s16, 1
      %s211 = scalar_select %p210, %s16, 1
      %s212 = smul.addr %s211, 16
      %s213 = smul.addr %s212, 8
      %s214 = scalar_lea.vmem %s5, %s213
      %p215 = scmp.lt.s32.totalorder %s16, 1
      %s216 = scalar_select %p215, %s16, 1
      %s217 = smul.addr %s216, 8
      %s218 = smul.addr %s217, 4
      %s219 = scalar_lea.vmem %s0, %s218
      %p220 = scmp.lt.s32.totalorder %s16, 1
      %s221 = scalar_select %p220, %s16, 1
      %s222 = smul.addr %s221, 16
      %s223 = smul.addr %s222, 8
      %s224 = scalar_lea.vmem %s5, %s223
      %v226 = vld [vmem:[%s219] sm:$0xf]
      %v227 = vld [vmem:[%s219 + $0x4] sm:$0xf]
      %v228 = vld [vmem:[%s219 + $0x8] sm:$0xf]
      %v229 = vld [vmem:[%s219 + $0xc] sm:$0xf]
      %v230 = vld [vmem:[%s219 + $0x10] sm:$0xf]
      %v231 = vld [vmem:[%s219 + $0x14] sm:$0xf]
      %v232 = vld [vmem:[%s219 + $0x18] sm:$0xf]
      %v233 = vld [vmem:[%s219 + $0x1c] sm:$0xf]
      %v234 = vld [vmem:[%s1] sm:$0xf]
      %v235 = vld [vmem:[%s1 + $0x4] sm:$0xf]
      %v244 = vunpack.c.l.b16 %v226
      %v245 = vunpack.c.l.b16 %v227
      %v246 = vunpack.c.l.b16 %v228
      %v247 = vunpack.c.l.b16 %v229
      %v248 = vunpack.c.l.b16 %v230
      %v249 = vunpack.c.l.b16 %v231
      %v250 = vunpack.c.l.b16 %v232
      %v251 = vunpack.c.l.b16 %v233
      %v252 = vpack.c.b16 %v245, %v244
      %v253 = vpack.c.b16 %v247, %v246
      %v254 = vpack.c.b16 %v249, %v248
      %v255 = vpack.c.b16 %v251, %v250
      %v258 = vunpack.c.l.b16 %v234
      %v259 = vunpack.c.l.b16 %v235
      %v260 = vpack.c.b16 %v259, %v258
      %vm262 = vcmask 130048
      %v264 = vsel %vm262, %v252, 0
      %v267 = vsel %vm262, %v253, 0
      %v270 = vsel %vm262, %v254, 0
      %v273 = vsel %vm262, %v255, 0
      %275 = vmatprep.subr.bf16.mxu0 0
      %276 = vmatpush1.bf16.msra.mxu0 %v260
      %277 = vmatprep.subr.bf16.mxu0 0
      %278 = vmatpush1.bf16.msra.mxu0 0
      %279 = vmatprep.subr.bf16.mxu0 0
      %280 = vmatpush1.bf16.msra.mxu0 0
      %281 = vmatprep.subr.bf16.mxu0 0
      %282 = vmatpush1.bf16.msra.mxu0 0
      %283 = vmatprep.subr.bf16.mxu0 0
      %284 = vmatpush1.bf16.msra.mxu0 0
      %285 = vmatprep.subr.bf16.mxu0 0
      %286 = vmatpush1.bf16.msra.mxu0 0
      %287 = vmatprep.subr.bf16.mxu0 0
      %288 = vmatpush1.bf16.msra.mxu0 0
      %289 = vmatprep.subr.bf16.mxu0 0
      %290 = vmatpush1.bf16.msra.mxu0 0
      %291 = vmatprep.subr.bf16.mxu0 0
      %292 = vmatpush1.bf16.msra.mxu0 0
      %293 = vmatprep.subr.bf16.mxu0 0
      %294 = vmatpush1.bf16.msra.mxu0 0
      %295 = vmatprep.subr.bf16.mxu0 0
      %296 = vmatpush1.bf16.msra.mxu0 0
      %297 = vmatprep.subr.bf16.mxu0 0
      %298 = vmatpush1.bf16.msra.mxu0 0
      %299 = vmatprep.subr.bf16.mxu0 0
      %300 = vmatpush1.bf16.msra.mxu0 0
      %301 = vmatprep.subr.bf16.mxu0 0
      %302 = vmatpush1.bf16.msra.mxu0 0
      %303 = vmatprep.subr.bf16.mxu0 0
      %304 = vmatpush1.bf16.msra.mxu0 0
      %305 = vmatprep.subr.bf16.mxu0 0
      %306 = vmatpush1.bf16.msra.mxu0 0
      %307 = vmatprep.mubr.bf16.mxu0 0
      %308 = vmatmul.mubr.bf16.gmra.mrb[0].mxu0 %v264
      %v309 = vpop.f32.mrb[0].mxu0
      %v310 = vadd.f32 0.0, %v309
      %v311 = vpop.f32.mrb[0].mxu0
      %v312 = vpop.f32.mrb[0].mxu0
      %v313 = vadd.f32 0.0, %v312
      %v314 = vpop.f32.mrb[0].mxu0
      %315 = vmatprep.mubr.bf16.mxu0 0
      %316 = vmatmul.mubr.bf16.gmra.mrb[0].mxu0 %v267
      %v317 = vpop.f32.mrb[0].mxu0
      %v318 = vadd.f32 0.0, %v317
      %v319 = vpop.f32.mrb[0].mxu0
      %v320 = vpop.f32.mrb[0].mxu0
      %v321 = vadd.f32 0.0, %v320
      %v322 = vpop.f32.mrb[0].mxu0
      %323 = vmatprep.mubr.bf16.mxu0 0
      %324 = vmatmul.mubr.bf16.gmra.mrb[0].mxu0 %v270
      %v325 = vpop.f32.mrb[0].mxu0
      %v326 = vadd.f32 0.0, %v325
      %v327 = vpop.f32.mrb[0].mxu0
      %v328 = vpop.f32.mrb[0].mxu0
      %v329 = vadd.f32 0.0, %v328
      %v330 = vpop.f32.mrb[0].mxu0
      %331 = vmatprep.mubr.bf16.mxu0 0
      %332 = vmatmul.mubr.bf16.gmra.mrb[0].mxu0 %v273
      %v333 = vpop.f32.mrb[0].mxu0
      %v334 = vadd.f32 0.0, %v333
      %v335 = vpop.f32.mrb[0].mxu0
      %v336 = vpop.f32.mrb[0].mxu0
      %v337 = vadd.f32 0.0, %v336
      %v338 = vpop.f32.mrb[0].mxu0
      %339 = vdwg.mxu0
      %v340 = vld [vmem:[%s2] sm:$0xf]
      %v341 = vld [vmem:[%s2 + $0x4] sm:$0xf]
      %v344 = vunpack.c.l.b16 %v340
      %v345 = vunpack.c.l.b16 %v341
      %v346 = vpack.c.b16 %v345, %v344
      %348 = vmatprep.subr.bf16.mxu0 0
      %349 = vmatpush1.bf16.msra.mxu0 %v346
      %350 = vmatprep.subr.bf16.mxu0 0
      %351 = vmatpush1.bf16.msra.mxu0 0
      %352 = vmatprep.subr.bf16.mxu0 0
      %353 = vmatpush1.bf16.msra.mxu0 0
      %354 = vmatprep.subr.bf16.mxu0 0
      %355 = vmatpush1.bf16.msra.mxu0 0
      %356 = vmatprep.subr.bf16.mxu0 0
      %357 = vmatpush1.bf16.msra.mxu0 0
      %358 = vmatprep.subr.bf16.mxu0 0
      %359 = vmatpush1.bf16.msra.mxu0 0
      %360 = vmatprep.subr.bf16.mxu0 0
      %361 = vmatpush1.bf16.msra.mxu0 0
      %362 = vmatprep.subr.bf16.mxu0 0
      %363 = vmatpush1.bf16.msra.mxu0 0
      %364 = vmatprep.subr.bf16.mxu0 0
      %365 = vmatpush1.bf16.msra.mxu0 0
      %366 = vmatprep.subr.bf16.mxu0 0
      %367 = vmatpush1.bf16.msra.mxu0 0
      %368 = vmatprep.subr.bf16.mxu0 0
      %369 = vmatpush1.bf16.msra.mxu0 0
      %370 = vmatprep.subr.bf16.mxu0 0
      %371 = vmatpush1.bf16.msra.mxu0 0
      %372 = vmatprep.subr.bf16.mxu0 0
      %373 = vmatpush1.bf16.msra.mxu0 0
      %374 = vmatprep.subr.bf16.mxu0 0
      %375 = vmatpush1.bf16.msra.mxu0 0
      %376 = vmatprep.subr.bf16.mxu0 0
      %377 = vmatpush1.bf16.msra.mxu0 0
      %378 = vmatprep.subr.bf16.mxu0 0
      %379 = vmatpush1.bf16.msra.mxu0 0
      %380 = vmatprep.mubr.bf16.mxu0 0
      %381 = vmatmul.mubr.bf16.gmra.mrb[0].mxu0 %v264
      %v382 = vpop.f32.mrb[0].mxu0
      %v383 = vadd.f32 0.0, %v382
      %v384 = vpop.f32.mrb[0].mxu0
      %v385 = vpop.f32.mrb[0].mxu0
      %v386 = vadd.f32 0.0, %v385
      %v387 = vpop.f32.mrb[0].mxu0
      %388 = vmatprep.mubr.bf16.mxu0 0
      %389 = vmatmul.mubr.bf16.gmra.mrb[0].mxu0 %v267
      %v390 = vpop.f32.mrb[0].mxu0
      %v391 = vadd.f32 0.0, %v390
      %v392 = vpop.f32.mrb[0].mxu0
      %v393 = vpop.f32.mrb[0].mxu0
      %v394 = vadd.f32 0.0, %v393
      %v395 = vpop.f32.mrb[0].mxu0
      %396 = vmatprep.mubr.bf16.mxu0 0
      %397 = vmatmul.mubr.bf16.gmra.mrb[0].mxu0 %v270
      %v398 = vpop.f32.mrb[0].mxu0
      %v399 = vadd.f32 0.0, %v398
      %v400 = vpop.f32.mrb[0].mxu0
      %v401 = vpop.f32.mrb[0].mxu0
      %v402 = vadd.f32 0.0, %v401
      %v403 = vpop.f32.mrb[0].mxu0
      %404 = vmatprep.mubr.bf16.mxu0 0
      %405 = vmatmul.mubr.bf16.gmra.mrb[0].mxu0 %v273
      %v406 = vpop.f32.mrb[0].mxu0
      %v407 = vadd.f32 0.0, %v406
      %v408 = vpop.f32.mrb[0].mxu0
      %v409 = vpop.f32.mrb[0].mxu0
      %v410 = vadd.f32 0.0, %v409
      %v411 = vpop.f32.mrb[0].mxu0
      %412 = vdwg.mxu0
      %413 = vxpose.xlu0.b32.start [1/16] %v310, 128
      %414 = vxpose.xlu0.b32.cont [2/16] %v313, 128
      %415 = vxpose.xlu0.b32.cont [3/16] 0.0, 128
      %416 = vxpose.xlu0.b32.cont [4/16] 0.0, 128
      %417 = vxpose.xlu0.b32.cont [5/16] 0.0, 128
      %418 = vxpose.xlu0.b32.cont [6/16] 0.0, 128
      %419 = vxpose.xlu0.b32.cont [7/16] 0.0, 128
      %420 = vxpose.xlu0.b32.cont [8/16] 0.0, 128
      %421 = vxpose.xlu0.b32.cont [9/16] 0.0, 128
      %422 = vxpose.xlu0.b32.cont [10/16] 0.0, 128
      %423 = vxpose.xlu0.b32.cont [11/16] 0.0, 128
      %424 = vxpose.xlu0.b32.cont [12/16] 0.0, 128
      %425 = vxpose.xlu0.b32.cont [13/16] 0.0, 128
      %426 = vxpose.xlu0.b32.cont [14/16] 0.0, 128
      %427 = vxpose.xlu0.b32.cont [15/16] 0.0, 128
      %428 = vxpose.xlu0.b32.end [16/16] 0.0, 128
      %v429 = vpop.trf.xlu0
      %v430 = vpop.trf.xlu0
      %v431 = vpop.trf.xlu0
      %v432 = vpop.trf.xlu0
      %v433 = vpop.trf.xlu0
      %v434 = vpop.trf.xlu0
      %v435 = vpop.trf.xlu0
      %v436 = vpop.trf.xlu0
      %v437 = vpop.trf.xlu0
      %v438 = vpop.trf.xlu0
      %v439 = vpop.trf.xlu0
      %v440 = vpop.trf.xlu0
      %v441 = vpop.trf.xlu0
      %v442 = vpop.trf.xlu0
      %v443 = vpop.trf.xlu0
      %v444 = vpop.trf.xlu0
      %445 = vxpose.xlu0.b32.start [1/16] %v318, 128
      %446 = vxpose.xlu0.b32.cont [2/16] %v321, 128
      %447 = vxpose.xlu0.b32.cont [3/16] 0.0, 128
      %448 = vxpose.xlu0.b32.cont [4/16] 0.0, 128
      %449 = vxpose.xlu0.b32.cont [5/16] 0.0, 128
      %450 = vxpose.xlu0.b32.cont [6/16] 0.0, 128
      %451 = vxpose.xlu0.b32.cont [7/16] 0.0, 128
      %452 = vxpose.xlu0.b32.cont [8/16] 0.0, 128
      %453 = vxpose.xlu0.b32.cont [9/16] 0.0, 128
      %454 = vxpose.xlu0.b32.cont [10/16] 0.0, 128
      %455 = vxpose.xlu0.b32.cont [11/16] 0.0, 128
      %456 = vxpose.xlu0.b32.cont [12/16] 0.0, 128
      %457 = vxpose.xlu0.b32.cont [13/16] 0.0, 128
      %458 = vxpose.xlu0.b32.cont [14/16] 0.0, 128
      %459 = vxpose.xlu0.b32.cont [15/16] 0.0, 128
      %460 = vxpose.xlu0.b32.end [16/16] 0.0, 128
      %v461 = vpop.trf.xlu0
      %v462 = vpop.trf.xlu0
      %v463 = vpop.trf.xlu0
      %v464 = vpop.trf.xlu0
      %v465 = vpop.trf.xlu0
      %v466 = vpop.trf.xlu0
      %v467 = vpop.trf.xlu0
      %v468 = vpop.trf.xlu0
      %v469 = vpop.trf.xlu0
      %v470 = vpop.trf.xlu0
      %v471 = vpop.trf.xlu0
      %v472 = vpop.trf.xlu0
      %v473 = vpop.trf.xlu0
      %v474 = vpop.trf.xlu0
      %v475 = vpop.trf.xlu0
      %v476 = vpop.trf.xlu0
      %477 = vxpose.xlu0.b32.start [1/16] %v326, 128
      %478 = vxpose.xlu0.b32.cont [2/16] %v329, 128
      %479 = vxpose.xlu0.b32.cont [3/16] 0.0, 128
      %480 = vxpose.xlu0.b32.cont [4/16] 0.0, 128
      %481 = vxpose.xlu0.b32.cont [5/16] 0.0, 128
      %482 = vxpose.xlu0.b32.cont [6/16] 0.0, 128
      %483 = vxpose.xlu0.b32.cont [7/16] 0.0, 128
      %484 = vxpose.xlu0.b32.cont [8/16] 0.0, 128
      %485 = vxpose.xlu0.b32.cont [9/16] 0.0, 128
      %486 = vxpose.xlu0.b32.cont [10/16] 0.0, 128
      %487 = vxpose.xlu0.b32.cont [11/16] 0.0, 128
      %488 = vxpose.xlu0.b32.cont [12/16] 0.0, 128
      %489 = vxpose.xlu0.b32.cont [13/16] 0.0, 128
      %490 = vxpose.xlu0.b32.cont [14/16] 0.0, 128
      %491 = vxpose.xlu0.b32.cont [15/16] 0.0, 128
      %492 = vxpose.xlu0.b32.end [16/16] 0.0, 128
      %v493 = vpop.trf.xlu0
      %v494 = vpop.trf.xlu0
      %v495 = vpop.trf.xlu0
      %v496 = vpop.trf.xlu0
      %v497 = vpop.trf.xlu0
      %v498 = vpop.trf.xlu0
      %v499 = vpop.trf.xlu0
      %v500 = vpop.trf.xlu0
      %v501 = vpop.trf.xlu0
      %v502 = vpop.trf.xlu0
      %v503 = vpop.trf.xlu0
      %v504 = vpop.trf.xlu0
      %v505 = vpop.trf.xlu0
      %v506 = vpop.trf.xlu0
      %v507 = vpop.trf.xlu0
      %v508 = vpop.trf.xlu0
      %509 = vxpose.xlu0.b32.start [1/16] %v334, 128
      %510 = vxpose.xlu0.b32.cont [2/16] %v337, 128
      %511 = vxpose.xlu0.b32.cont [3/16] 0.0, 128
      %512 = vxpose.xlu0.b32.cont [4/16] 0.0, 128
      %513 = vxpose.xlu0.b32.cont [5/16] 0.0, 128
      %514 = vxpose.xlu0.b32.cont [6/16] 0.0, 128
      %515 = vxpose.xlu0.b32.cont [7/16] 0.0, 128
      %516 = vxpose.xlu0.b32.cont [8/16] 0.0, 128
      %517 = vxpose.xlu0.b32.cont [9/16] 0.0, 128
      %518 = vxpose.xlu0.b32.cont [10/16] 0.0, 128
      %519 = vxpose.xlu0.b32.cont [11/16] 0.0, 128
      %520 = vxpose.xlu0.b32.cont [12/16] 0.0, 128
      %521 = vxpose.xlu0.b32.cont [13/16] 0.0, 128
      %522 = vxpose.xlu0.b32.cont [14/16] 0.0, 128
      %523 = vxpose.xlu0.b32.cont [15/16] 0.0, 128
      %524 = vxpose.xlu0.b32.end [16/16] 0.0, 128
      %v525 = vpop.trf.xlu0
      %v526 = vpop.trf.xlu0
      %v527 = vpop.trf.xlu0
      %v528 = vpop.trf.xlu0
      %v529 = vpop.trf.xlu0
      %v530 = vpop.trf.xlu0
      %v531 = vpop.trf.xlu0
      %v532 = vpop.trf.xlu0
      %v533 = vpop.trf.xlu0
      %v534 = vpop.trf.xlu0
      %v535 = vpop.trf.xlu0
      %v536 = vpop.trf.xlu0
      %v537 = vpop.trf.xlu0
      %v538 = vpop.trf.xlu0
      %v539 = vpop.trf.xlu0
      %v540 = vpop.trf.xlu0
      %541 = vxpose.xlu0.b32.start [1/16] %v383, 128
      %542 = vxpose.xlu0.b32.cont [2/16] %v386, 128
      %543 = vxpose.xlu0.b32.cont [3/16] 0.0, 128
      %544 = vxpose.xlu0.b32.cont [4/16] 0.0, 128
      %545 = vxpose.xlu0.b32.cont [5/16] 0.0, 128
      %546 = vxpose.xlu0.b32.cont [6/16] 0.0, 128
      %547 = vxpose.xlu0.b32.cont [7/16] 0.0, 128
      %548 = vxpose.xlu0.b32.cont [8/16] 0.0, 128
      %549 = vxpose.xlu0.b32.cont [9/16] 0.0, 128
      %550 = vxpose.xlu0.b32.cont [10/16] 0.0, 128
      %551 = vxpose.xlu0.b32.cont [11/16] 0.0, 128
      %552 = vxpose.xlu0.b32.cont [12/16] 0.0, 128
      %553 = vxpose.xlu0.b32.cont [13/16] 0.0, 128
      %554 = vxpose.xlu0.b32.cont [14/16] 0.0, 128
      %555 = vxpose.xlu0.b32.cont [15/16] 0.0, 128
      %556 = vxpose.xlu0.b32.end [16/16] 0.0, 128
      %v557 = vpop.trf.xlu0
      %v558 = vpop.trf.xlu0
      %v559 = vpop.trf.xlu0
      %v560 = vpop.trf.xlu0
      %v561 = vpop.trf.xlu0
      %v562 = vpop.trf.xlu0
      %v563 = vpop.trf.xlu0
      %v564 = vpop.trf.xlu0
      %v565 = vpop.trf.xlu0
      %v566 = vpop.trf.xlu0
      %v567 = vpop.trf.xlu0
      %v568 = vpop.trf.xlu0
      %v569 = vpop.trf.xlu0
      %v570 = vpop.trf.xlu0
      %v571 = vpop.trf.xlu0
      %v572 = vpop.trf.xlu0
      %573 = vxpose.xlu0.b32.start [1/16] %v391, 128
      %574 = vxpose.xlu0.b32.cont [2/16] %v394, 128
      %575 = vxpose.xlu0.b32.cont [3/16] 0.0, 128
      %576 = vxpose.xlu0.b32.cont [4/16] 0.0, 128
      %577 = vxpose.xlu0.b32.cont [5/16] 0.0, 128
      %578 = vxpose.xlu0.b32.cont [6/16] 0.0, 128
      %579 = vxpose.xlu0.b32.cont [7/16] 0.0, 128
      %580 = vxpose.xlu0.b32.cont [8/16] 0.0, 128
      %581 = vxpose.xlu0.b32.cont [9/16] 0.0, 128
      %582 = vxpose.xlu0.b32.cont [10/16] 0.0, 128
      %583 = vxpose.xlu0.b32.cont [11/16] 0.0, 128
      %584 = vxpose.xlu0.b32.cont [12/16] 0.0, 128
      %585 = vxpose.xlu0.b32.cont [13/16] 0.0, 128
      %586 = vxpose.xlu0.b32.cont [14/16] 0.0, 128
      %587 = vxpose.xlu0.b32.cont [15/16] 0.0, 128
      %588 = vxpose.xlu0.b32.end [16/16] 0.0, 128
      %v589 = vpop.trf.xlu0
      %v590 = vpop.trf.xlu0
      %v591 = vpop.trf.xlu0
      %v592 = vpop.trf.xlu0
      %v593 = vpop.trf.xlu0
      %v594 = vpop.trf.xlu0
      %v595 = vpop.trf.xlu0
      %v596 = vpop.trf.xlu0
      %v597 = vpop.trf.xlu0
      %v598 = vpop.trf.xlu0
      %v599 = vpop.trf.xlu0
      %v600 = vpop.trf.xlu0
      %v601 = vpop.trf.xlu0
      %v602 = vpop.trf.xlu0
      %v603 = vpop.trf.xlu0
      %v604 = vpop.trf.xlu0
      %605 = vxpose.xlu0.b32.start [1/16] %v399, 128
      %606 = vxpose.xlu0.b32.cont [2/16] %v402, 128
      %607 = vxpose.xlu0.b32.cont [3/16] 0.0, 128
      %608 = vxpose.xlu0.b32.cont [4/16] 0.0, 128
      %609 = vxpose.xlu0.b32.cont [5/16] 0.0, 128
      %610 = vxpose.xlu0.b32.cont [6/16] 0.0, 128
      %611 = vxpose.xlu0.b32.cont [7/16] 0.0, 128
      %612 = vxpose.xlu0.b32.cont [8/16] 0.0, 128
      %613 = vxpose.xlu0.b32.cont [9/16] 0.0, 128
      %614 = vxpose.xlu0.b32.cont [10/16] 0.0, 128
      %615 = vxpose.xlu0.b32.cont [11/16] 0.0, 128
      %616 = vxpose.xlu0.b32.cont [12/16] 0.0, 128
      %617 = vxpose.xlu0.b32.cont [13/16] 0.0, 128
      %618 = vxpose.xlu0.b32.cont [14/16] 0.0, 128
      %619 = vxpose.xlu0.b32.cont [15/16] 0.0, 128
      %620 = vxpose.xlu0.b32.end [16/16] 0.0, 128
      %v621 = vpop.trf.xlu0
      %v622 = vpop.trf.xlu0
      %v623 = vpop.trf.xlu0
      %v624 = vpop.trf.xlu0
      %v625 = vpop.trf.xlu0
      %v626 = vpop.trf.xlu0
      %v627 = vpop.trf.xlu0
      %v628 = vpop.trf.xlu0
      %v629 = vpop.trf.xlu0
      %v630 = vpop.trf.xlu0
      %v631 = vpop.trf.xlu0
      %v632 = vpop.trf.xlu0
      %v633 = vpop.trf.xlu0
      %v634 = vpop.trf.xlu0
      %v635 = vpop.trf.xlu0
      %v636 = vpop.trf.xlu0
      %637 = vxpose.xlu0.b32.start [1/16] %v407, 128
      %638 = vxpose.xlu0.b32.cont [2/16] %v410, 128
      %639 = vxpose.xlu0.b32.cont [3/16] 0.0, 128
      %640 = vxpose.xlu0.b32.cont [4/16] 0.0, 128
      %641 = vxpose.xlu0.b32.cont [5/16] 0.0, 128
      %642 = vxpose.xlu0.b32.cont [6/16] 0.0, 128
      %643 = vxpose.xlu0.b32.cont [7/16] 0.0, 128
      %644 = vxpose.xlu0.b32.cont [8/16] 0.0, 128
      %645 = vxpose.xlu0.b32.cont [9/16] 0.0, 128
      %646 = vxpose.xlu0.b32.cont [10/16] 0.0, 128
      %647 = vxpose.xlu0.b32.cont [11/16] 0.0, 128
      %648 = vxpose.xlu0.b32.cont [12/16] 0.0, 128
      %649 = vxpose.xlu0.b32.cont [13/16] 0.0, 128
      %650 = vxpose.xlu0.b32.cont [14/16] 0.0, 128
      %651 = vxpose.xlu0.b32.cont [15/16] 0.0, 128
      %652 = vxpose.xlu0.b32.end [16/16] 0.0, 128
      %v653 = vpop.trf.xlu0
      %v654 = vpop.trf.xlu0
      %v655 = vpop.trf.xlu0
      %v656 = vpop.trf.xlu0
      %v657 = vpop.trf.xlu0
      %v658 = vpop.trf.xlu0
      %v659 = vpop.trf.xlu0
      %v660 = vpop.trf.xlu0
      %v661 = vpop.trf.xlu0
      %v662 = vpop.trf.xlu0
      %v663 = vpop.trf.xlu0
      %v664 = vpop.trf.xlu0
      %v665 = vpop.trf.xlu0
      %v666 = vpop.trf.xlu0
      %v667 = vpop.trf.xlu0
      %v668 = vpop.trf.xlu0
      %v669 = vpack.c.bf16 %v430, %v429
      %v670 = vpack.c.bf16 %v462, %v461
      %v671 = vpack.c.bf16 %v494, %v493
      %v672 = vpack.c.bf16 %v526, %v525
      %v673 = vpack.c.bf16 %v558, %v557
      %v674 = vpack.c.bf16 %v590, %v589
      %v675 = vpack.c.bf16 %v622, %v621
      %v676 = vpack.c.bf16 %v654, %v653
      %v677 = vld [vmem:[%s3] sm:$0xf]
      %v678 = vld [vmem:[%s3 + $0x4] sm:$0xf]
      %v681 = vunpack.c.l.b16 %v677
      %v682 = vunpack.c.l.b16 %v678
      %v683 = vpack.c.b16 %v682, %v681
      %v686 = vsel %vm262, %v669, 0
      %v689 = vsel %vm262, %v670, 0
      %v692 = vsel %vm262, %v671, 0
      %v695 = vsel %vm262, %v672, 0
      %v698 = vsel %vm262, %v673, 0
      %v701 = vsel %vm262, %v674, 0
      %v704 = vsel %vm262, %v675, 0
      %v707 = vsel %vm262, %v676, 0
      %709 = vmatprep.subr.bf16.mxu0 0
      %710 = vmatpush1.bf16.msra.mxu0 %v683
      %711 = vmatprep.subr.bf16.mxu0 0
      %712 = vmatpush1.bf16.msra.mxu0 0
      %713 = vmatprep.subr.bf16.mxu0 0
      %714 = vmatpush1.bf16.msra.mxu0 0
      %715 = vmatprep.subr.bf16.mxu0 0
      %716 = vmatpush1.bf16.msra.mxu0 0
      %717 = vmatprep.subr.bf16.mxu0 0
      %718 = vmatpush1.bf16.msra.mxu0 0
      %719 = vmatprep.subr.bf16.mxu0 0
      %720 = vmatpush1.bf16.msra.mxu0 0
      %721 = vmatprep.subr.bf16.mxu0 0
      %722 = vmatpush1.bf16.msra.mxu0 0
      %723 = vmatprep.subr.bf16.mxu0 0
      %724 = vmatpush1.bf16.msra.mxu0 0
      %725 = vmatprep.subr.bf16.mxu0 0
      %726 = vmatpush1.bf16.msra.mxu0 0
      %727 = vmatprep.subr.bf16.mxu0 0
      %728 = vmatpush1.bf16.msra.mxu0 0
      %729 = vmatprep.subr.bf16.mxu0 0
      %730 = vmatpush1.bf16.msra.mxu0 0
      %731 = vmatprep.subr.bf16.mxu0 0
      %732 = vmatpush1.bf16.msra.mxu0 0
      %733 = vmatprep.subr.bf16.mxu0 0
      %734 = vmatpush1.bf16.msra.mxu0 0
      %735 = vmatprep.subr.bf16.mxu0 0
      %736 = vmatpush1.bf16.msra.mxu0 0
      %737 = vmatprep.subr.bf16.mxu0 0
      %738 = vmatpush1.bf16.msra.mxu0 0
      %739 = vmatprep.subr.bf16.mxu0 0
      %740 = vmatpush1.bf16.msra.mxu0 0
      %741 = vmatprep.mubr.bf16.mxu0 0
      %742 = vmatmul.mubr.bf16.gmra.mrb[0].mxu0 %v686
      %v743 = vpop.f32.mrb[0].mxu0
      %v744 = vadd.f32 0.0, %v743
      %v745 = vpop.f32.mrb[0].mxu0
      %v746 = vpop.f32.mrb[0].mxu0
      %v747 = vadd.f32 0.0, %v746
      %v748 = vpop.f32.mrb[0].mxu0
      %749 = vmatprep.mubr.bf16.mxu0 0
      %750 = vmatmul.mubr.bf16.gmra.mrb[0].mxu0 %v689
      %v751 = vpop.f32.mrb[0].mxu0
      %v752 = vadd.f32 0.0, %v751
      %v753 = vpop.f32.mrb[0].mxu0
      %v754 = vpop.f32.mrb[0].mxu0
      %v755 = vadd.f32 0.0, %v754
      %v756 = vpop.f32.mrb[0].mxu0
      %757 = vmatprep.mubr.bf16.mxu0 0
      %758 = vmatmul.mubr.bf16.gmra.mrb[0].mxu0 %v692
      %v759 = vpop.f32.mrb[0].mxu0
      %v760 = vadd.f32 0.0, %v759
      %v761 = vpop.f32.mrb[0].mxu0
      %v762 = vpop.f32.mrb[0].mxu0
      %v763 = vadd.f32 0.0, %v762
      %v764 = vpop.f32.mrb[0].mxu0
      %765 = vmatprep.mubr.bf16.mxu0 0
      %766 = vmatmul.mubr.bf16.gmra.mrb[0].mxu0 %v695
      %v767 = vpop.f32.mrb[0].mxu0
      %v768 = vadd.f32 0.0, %v767
      %v769 = vpop.f32.mrb[0].mxu0
      %v770 = vpop.f32.mrb[0].mxu0
      %v771 = vadd.f32 0.0, %v770
      %v772 = vpop.f32.mrb[0].mxu0
      %773 = vmatprep.mubr.bf16.mxu0 0
      %774 = vmatmul.mubr.bf16.gmra.mrb[0].mxu0 %v698
      %v775 = vpop.f32.mrb[0].mxu0
      %v776 = vadd.f32 0.0, %v775
      %v777 = vpop.f32.mrb[0].mxu0
      %v778 = vpop.f32.mrb[0].mxu0
      %v779 = vadd.f32 0.0, %v778
      %v780 = vpop.f32.mrb[0].mxu0
      %781 = vmatprep.mubr.bf16.mxu0 0
      %782 = vmatmul.mubr.bf16.gmra.mrb[0].mxu0 %v701
      %v783 = vpop.f32.mrb[0].mxu0
      %v784 = vadd.f32 0.0, %v783
      %v785 = vpop.f32.mrb[0].mxu0
      %v786 = vpop.f32.mrb[0].mxu0
      %v787 = vadd.f32 0.0, %v786
      %v788 = vpop.f32.mrb[0].mxu0
      %789 = vmatprep.mubr.bf16.mxu0 0
      %790 = vmatmul.mubr.bf16.gmra.mrb[0].mxu0 %v704
      %v791 = vpop.f32.mrb[0].mxu0
      %v792 = vadd.f32 0.0, %v791
      %v793 = vpop.f32.mrb[0].mxu0
      %v794 = vpop.f32.mrb[0].mxu0
      %v795 = vadd.f32 0.0, %v794
      %v796 = vpop.f32.mrb[0].mxu0
      %797 = vmatprep.mubr.bf16.mxu0 0
      %798 = vmatmul.mubr.bf16.gmra.mrb[0].mxu0 %v707
      %v799 = vpop.f32.mrb[0].mxu0
      %v800 = vadd.f32 0.0, %v799
      %v801 = vpop.f32.mrb[0].mxu0
      %v802 = vpop.f32.mrb[0].mxu0
      %v803 = vadd.f32 0.0, %v802
      %v804 = vpop.f32.mrb[0].mxu0
      %805 = vdwg.mxu0
      %v806 = vld [vmem:[%s4] sm:$0xf]
      %v807 = vld [vmem:[%s4 + $0x4] sm:$0xf]
      %v810 = vunpack.c.l.b16 %v806
      %v811 = vunpack.c.l.b16 %v807
      %v812 = vpack.c.b16 %v811, %v810
      %814 = vmatprep.subr.bf16.mxu0 0
      %815 = vmatpush1.bf16.msra.mxu0 %v812
      %816 = vmatprep.subr.bf16.mxu0 0
      %817 = vmatpush1.bf16.msra.mxu0 0
      %818 = vmatprep.subr.bf16.mxu0 0
      %819 = vmatpush1.bf16.msra.mxu0 0
      %820 = vmatprep.subr.bf16.mxu0 0
      %821 = vmatpush1.bf16.msra.mxu0 0
      %822 = vmatprep.subr.bf16.mxu0 0
      %823 = vmatpush1.bf16.msra.mxu0 0
      %824 = vmatprep.subr.bf16.mxu0 0
      %825 = vmatpush1.bf16.msra.mxu0 0
      %826 = vmatprep.subr.bf16.mxu0 0
      %827 = vmatpush1.bf16.msra.mxu0 0
      %828 = vmatprep.subr.bf16.mxu0 0
      %829 = vmatpush1.bf16.msra.mxu0 0
      %830 = vmatprep.subr.bf16.mxu0 0
      %831 = vmatpush1.bf16.msra.mxu0 0
      %832 = vmatprep.subr.bf16.mxu0 0
      %833 = vmatpush1.bf16.msra.mxu0 0
      %834 = vmatprep.subr.bf16.mxu0 0
      %835 = vmatpush1.bf16.msra.mxu0 0
      %836 = vmatprep.subr.bf16.mxu0 0
      %837 = vmatpush1.bf16.msra.mxu0 0
      %838 = vmatprep.subr.bf16.mxu0 0
      %839 = vmatpush1.bf16.msra.mxu0 0
      %840 = vmatprep.subr.bf16.mxu0 0
      %841 = vmatpush1.bf16.msra.mxu0 0
      %842 = vmatprep.subr.bf16.mxu0 0
      %843 = vmatpush1.bf16.msra.mxu0 0
      %844 = vmatprep.subr.bf16.mxu0 0
      %845 = vmatpush1.bf16.msra.mxu0 0
      %846 = vmatprep.mubr.bf16.mxu0 0
      %847 = vmatmul.mubr.bf16.gmra.mrb[0].mxu0 %v686
      %v848 = vpop.f32.mrb[0].mxu0
      %v849 = vadd.f32 0.0, %v848
      %v850 = vpop.f32.mrb[0].mxu0
      %v851 = vpop.f32.mrb[0].mxu0
      %v852 = vadd.f32 0.0, %v851
      %v853 = vpop.f32.mrb[0].mxu0
      %854 = vmatprep.mubr.bf16.mxu0 0
      %855 = vmatmul.mubr.bf16.gmra.mrb[0].mxu0 %v689
      %v856 = vpop.f32.mrb[0].mxu0
      %v857 = vadd.f32 0.0, %v856
      %v858 = vpop.f32.mrb[0].mxu0
      %v859 = vpop.f32.mrb[0].mxu0
      %v860 = vadd.f32 0.0, %v859
      %v861 = vpop.f32.mrb[0].mxu0
      %862 = vmatprep.mubr.bf16.mxu0 0
      %863 = vmatmul.mubr.bf16.gmra.mrb[0].mxu0 %v692
      %v864 = vpop.f32.mrb[0].mxu0
      %v865 = vadd.f32 0.0, %v864
      %v866 = vpop.f32.mrb[0].mxu0
      %v867 = vpop.f32.mrb[0].mxu0
      %v868 = vadd.f32 0.0, %v867
      %v869 = vpop.f32.mrb[0].mxu0
      %870 = vmatprep.mubr.bf16.mxu0 0
      %871 = vmatmul.mubr.bf16.gmra.mrb[0].mxu0 %v695
      %v872 = vpop.f32.mrb[0].mxu0
      %v873 = vadd.f32 0.0, %v872
      %v874 = vpop.f32.mrb[0].mxu0
      %v875 = vpop.f32.mrb[0].mxu0
      %v876 = vadd.f32 0.0, %v875
      %v877 = vpop.f32.mrb[0].mxu0
      %878 = vmatprep.mubr.bf16.mxu0 0
      %879 = vmatmul.mubr.bf16.gmra.mrb[0].mxu0 %v698
      %v880 = vpop.f32.mrb[0].mxu0
      %v881 = vadd.f32 0.0, %v880
      %v882 = vpop.f32.mrb[0].mxu0
      %v883 = vpop.f32.mrb[0].mxu0
      %v884 = vadd.f32 0.0, %v883
      %v885 = vpop.f32.mrb[0].mxu0
      %886 = vmatprep.mubr.bf16.mxu0 0
      %887 = vmatmul.mubr.bf16.gmra.mrb[0].mxu0 %v701
      %v888 = vpop.f32.mrb[0].mxu0
      %v889 = vadd.f32 0.0, %v888
      %v890 = vpop.f32.mrb[0].mxu0
      %v891 = vpop.f32.mrb[0].mxu0
      %v892 = vadd.f32 0.0, %v891
      %v893 = vpop.f32.mrb[0].mxu0
      %894 = vmatprep.mubr.bf16.mxu0 0
      %895 = vmatmul.mubr.bf16.gmra.mrb[0].mxu0 %v704
      %v896 = vpop.f32.mrb[0].mxu0
      %v897 = vadd.f32 0.0, %v896
      %v898 = vpop.f32.mrb[0].mxu0
      %v899 = vpop.f32.mrb[0].mxu0
      %v900 = vadd.f32 0.0, %v899
      %v901 = vpop.f32.mrb[0].mxu0
      %902 = vmatprep.mubr.bf16.mxu0 0
      %903 = vmatmul.mubr.bf16.gmra.mrb[0].mxu0 %v707
      %v904 = vpop.f32.mrb[0].mxu0
      %v905 = vadd.f32 0.0, %v904
      %v906 = vpop.f32.mrb[0].mxu0
      %v907 = vpop.f32.mrb[0].mxu0
      %v908 = vadd.f32 0.0, %v907
      %v909 = vpop.f32.mrb[0].mxu0
      %910 = vdwg.mxu0
      %v911 = vsub.f32 %v744, %v881
      %v912 = vsub.f32 %v747, %v884
      %v913 = vsub.f32 %v752, %v889
      %v914 = vsub.f32 %v755, %v892
      %v915 = vsub.f32 %v760, %v897
      %v916 = vsub.f32 %v763, %v900
      %v917 = vsub.f32 %v768, %v905
      %v918 = vsub.f32 %v771, %v908
      %v919 = vadd.f32 %v776, %v849
      %v920 = vadd.f32 %v779, %v852
      %v921 = vadd.f32 %v784, %v857
      %v922 = vadd.f32 %v787, %v860
      %v923 = vadd.f32 %v792, %v865
      %v924 = vadd.f32 %v795, %v868
      %v925 = vadd.f32 %v800, %v873
      %v926 = vadd.f32 %v803, %v876
      %927 = vst.msk [vmem:[%s224] sm:$0xff] %vm262, %v911
      %928 = vst.msk [vmem:[%s224 + $0x8] sm:$0xff] %vm262, %v912
      %929 = vst.msk [vmem:[%s224 + $0x10] sm:$0xff] %vm262, %v913
      %930 = vst.msk [vmem:[%s224 + $0x18] sm:$0xff] %vm262, %v914
      %931 = vst.msk [vmem:[%s224 + $0x20] sm:$0xff] %vm262, %v915
      %932 = vst.msk [vmem:[%s224 + $0x28] sm:$0xff] %vm262, %v916
      %933 = vst.msk [vmem:[%s224 + $0x30] sm:$0xff] %vm262, %v917
      %934 = vst.msk [vmem:[%s224 + $0x38] sm:$0xff] %vm262, %v918
      %935 = vst.msk [vmem:[%s224 + $0x40] sm:$0xff] %vm262, %v919
      %936 = vst.msk [vmem:[%s224 + $0x48] sm:$0xff] %vm262, %v920
      %937 = vst.msk [vmem:[%s224 + $0x50] sm:$0xff] %vm262, %v921
      %938 = vst.msk [vmem:[%s224 + $0x58] sm:$0xff] %vm262, %v922
      %939 = vst.msk [vmem:[%s224 + $0x60] sm:$0xff] %vm262, %v923
      %940 = vst.msk [vmem:[%s224 + $0x68] sm:$0xff] %vm262, %v924
      %941 = vst.msk [vmem:[%s224 + $0x70] sm:$0xff] %vm262, %v925
      %942 = vst.msk [vmem:[%s224 + $0x78] sm:$0xff] %vm262, %v926
      %p943 = scmp.lt.s32.totalorder %s16, 1
      %s944 = scalar_select %p943, %s16, 1
      %s945 = smul.addr %s944, 16
      %s946 = smul.addr %s945, 8
      %s947 = scalar_lea.vmem %s5, %s946
      // Predicated region
      $region41: #{fourier_unit.3} parent=39 // pred_check
        %p948 = pneg %p144
      $region42: #{fourier_unit.3} parent=39 // pred_check_branch
        %950 = sbr.rel (%p948) target = $region44
      $region43: #{fourier_unit.3} parent=39 // pred_region
        _
      $region44: #{fourier_unit.3} parent=39 // pred_fallthru
        _
    $region40: #{fourier_unit.3} parent=5 // pred_fallthru
      _
    %p951 = scmp.le.s32.totalorder 2, %s11
    // Predicated region
    $region45: #{fourier_unit.3} parent=5 // pred_check
      %p952 = pneg %p951
    $region46: #{fourier_unit.3} parent=5 // pred_check_branch
      %954 = sbr.rel (%p952) target = $region48
    $region47: #{fourier_unit.3} parent=5 // pred_region
      %s955 = ssub.s32 %s11, 2
      // Predicated region
      $region49: #{fourier_unit.3} parent=47 // pred_check
        %p956 = pneg %p150
      $region50: #{fourier_unit.3} parent=47 // pred_check_branch
        %958 = sbr.rel (%p956) target = $region52
      $region51: #{fourier_unit.3} parent=47 // pred_region
        %p959 = scmp.lt.s32.totalorder %s17, 1
        %s960 = scalar_select %p959, %s17, 1
        %s961 = smul.addr %s960, 16
        %s962 = smul.addr %s961, 8
        %s963 = scalar_lea.vmem %s5, %s962
      $region52: #{fourier_unit.3} parent=47 // pred_fallthru
        _
    $region48: #{fourier_unit.3} parent=5 // pred_fallthru
      _
  $region6: #{fourier_unit.3} parent=0 // loop_footer
    %s15 = sadd.s32 1, %s11
  $region7: #{fourier_unit.3} parent=0 // loop_footer_branch
    %10 = sbr.rel target = $region3
  $region8: #{fourier_unit.3} parent=0 // loop_exit
    _

// kernel: fourier_unit.5
$region0: #{fourier_unit.5}
  #allocation0 [shape = 'u32[]', space=smem, size = 0x4, offset = 0x4, fixed_abs, tag = 'smem constant byte address 0x4 - core index']
  #allocation1 [shape = 'u32[144,128]{1,0:T(1,128)}', space=vmem, size = 0x12000, scoped, tag = 'internal scratch']
  %s0 = inlined_call_operand.vmem [shape: f32[2,8,16,16], index: 0, kind: input, shape index: {}]
  %s1 = inlined_call_operand.vmem [shape: f32[8,1,1], index: 1, kind: input, shape index: {}]
  %s2 = inlined_call_operand.vmem [shape: f32[8,1,1], index: 2, kind: input, shape index: {}]
  %s3 = inlined_call_operand.vmem [shape: bf16[16,16], index: 3, kind: input, shape index: {}, may-alias: {3,5}]
  %s4 = inlined_call_operand.vmem [shape: bf16[16,16], index: 4, kind: input, shape index: {}, may-alias: {4,6}]
  %s5 = inlined_call_operand.vmem [shape: bf16[16,16], index: 5, kind: input, shape index: {}, may-alias: {3,5}]
  %s6 = inlined_call_operand.vmem [shape: bf16[16,16], index: 6, kind: input, shape index: {}, may-alias: {4,6}]
  %s7 = inlined_call_operand.hbm [shape: f32[2,4,16,16], index: 7, kind: output, shape index: {}]
  %s8 = sld [smem:[#allocation0]]
  $region61: #{fourier_unit.5} parent=0
    _
  %s10 = ssub.s32 1, %s8
  %s11 = scalar_select 0, %s10, %s8
  $region1: #{fourier_unit.5} parent=0
    #allocation2 [shape = 'u8[65536]{0}', space=vmem, size = 0x10000, scoped, tag = 'output window, operand 0']
    #allocation3 [shape = 's32[2]{0}', space=sflag, size = 0x8, scoped, tag = 'scoped memory for fourier_unit.5']
    %12 = vsyncpa [#allocation3], 0
    %s13 = scalar_lea.sflag [#allocation3], 1
    %14 = vsyncpa %s13, 0
    loop: start=0, step=1, limit=4
    $region2: #{fourier_unit.5} parent=1 // loop_pre_header
      _
    $region3: #{fourier_unit.5} parent=1 // loop_header
      %s16 = sphi 0, %s20
      %p17 = scmp.ge.s32.totalorder %s16, 4
      %s26 = sphi 0, %s28
      %s29 = sphi 0, %s26
      %s30 = sphi 0, %s29
      %s46 = sphi 0, %s30
      %s50 = sphi 0, %s50
      %s52 = sphi 0, %s50
      %s53 = sphi 0, %s52
      %s67 = sphi 0, %s53
      %s71 = sphi 0, %s71
      %s73 = sphi 0, %s71
      %s74 = sphi 0, %s73
      %s88 = sphi 0, %s74
      %s92 = sphi 0, %s92
      %s94 = sphi 0, %s92
      %s95 = sphi 0, %s94
      %s109 = sphi 0, %s95
      %s113 = sphi 0, %s113
      %s115 = sphi 0, %s113
      %s116 = sphi 0, %s115
      %s130 = sphi 0, %s116
      %s134 = sphi 0, %s134
      %s136 = sphi 0, %s134
      %s137 = sphi 0, %s136
      %s151 = sphi 0, %s137
      %s155 = sphi 0, %s155
      %s157 = sphi 0, %s155
      %s158 = sphi 0, %s157
      %s172 = sphi 0, %s158
      %s178 = sphi 0, %s180
      %s181 = sphi 0, %s178
      %s182 = sphi 0, %s181
      %s198 = sphi 0, %s182
    $region4: #{fourier_unit.5} parent=1 // loop_header_branch
      %19 = sbr.rel (%p17) target = $region8
    $region5: #{fourier_unit.5} parent=1 // loop_body
      %s21 = ssub.s32 %s16, 1
      %s22 = ssub.s32 %s16, 2
      %s23 = sadd.s32 %s16, 1
      %s24 = ssub.s32 %s16, %s23
      %p25 = scmp.eq.s32.totalorder %s24, 0
      %s27 = sadd.s32 %s26, 1
      %s28 = scalar_select %p25, %s26, %s27
      %p31 = pneg %p25
      %p32 = scmp.eq.s32.totalorder %s16, 1
      %p33 = por %p31, %p32
      %p34 = scmp.ne.s32.totalorder %s26, %s29
      %p35 = scmp.eq.s32.totalorder %s16, 0
      %p36 = por %p34, %p35
      %p37 = scmp.ne.s32.totalorder %s26, %s29
      %p38 = scmp.eq.s32.totalorder %s21, 1
      %p39 = por %p37, %p38
      %p40 = scmp.ne.s32.totalorder %s29, %s30
      %p41 = scmp.eq.s32.totalorder %s21, 0
      %p42 = por %p40, %p41
      %p43 = scmp.ne.s32.totalorder %s29, %s30
      %p44 = scmp.eq.s32.totalorder %s22, 1
      %p45 = por %p43, %p44
      %p47 = scmp.ne.s32.totalorder %s30, %s46
      %p48 = scmp.eq.s32.totalorder %s22, 0
      %p49 = por %p47, %p48
      %s51 = sadd.s32 %s50, 1
      %p54 = scmp.eq.s32.totalorder %s16, 1
      %p55 = scmp.ne.s32.totalorder %s50, %s52
      %p56 = scmp.eq.s32.totalorder %s16, 0
      %p57 = por %p55, %p56
      %p58 = scmp.ne.s32.totalorder %s50, %s52
      %p59 = scmp.eq.s32.totalorder %s21, 1
      %p60 = por %p58, %p59
      %p61 = scmp.ne.s32.totalorder %s52, %s53
      %p62 = scmp.eq.s32.totalorder %s21, 0
      %p63 = por %p61, %p62
      %p64 = scmp.ne.s32.totalorder %s52, %s53
      %p65 = scmp.eq.s32.totalorder %s22, 1
      %p66 = por %p64, %p65
      %p68 = scmp.ne.s32.totalorder %s53, %s67
      %p69 = scmp.eq.s32.totalorder %s22, 0
      %p70 = por %p68, %p69
      %s72 = sadd.s32 %s71, 1
      %p75 = scmp.eq.s32.totalorder %s16, 1
      %p76 = scmp.ne.s32.totalorder %s71, %s73
      %p77 = scmp.eq.s32.totalorder %s16, 0
      %p78 = por %p76, %p77
      %p79 = scmp.ne.s32.totalorder %s71, %s73
      %p80 = scmp.eq.s32.totalorder %s21, 1
      %p81 = por %p79, %p80
      %p82 = scmp.ne.s32.totalorder %s73, %s74
      %p83 = scmp.eq.s32.totalorder %s21, 0
      %p84 = por %p82, %p83
      %p85 = scmp.ne.s32.totalorder %s73, %s74
      %p86 = scmp.eq.s32.totalorder %s22, 1
      %p87 = por %p85, %p86
      %p89 = scmp.ne.s32.totalorder %s74, %s88
      %p90 = scmp.eq.s32.totalorder %s22, 0
      %p91 = por %p89, %p90
      %s93 = sadd.s32 %s92, 1
      %p96 = scmp.eq.s32.totalorder %s16, 1
      %p97 = scmp.ne.s32.totalorder %s92, %s94
      %p98 = scmp.eq.s32.totalorder %s16, 0
      %p99 = por %p97, %p98
      %p100 = scmp.ne.s32.totalorder %s92, %s94
      %p101 = scmp.eq.s32.totalorder %s21, 1
      %p102 = por %p100, %p101
      %p103 = scmp.ne.s32.totalorder %s94, %s95
      %p104 = scmp.eq.s32.totalorder %s21, 0
      %p105 = por %p103, %p104
      %p106 = scmp.ne.s32.totalorder %s94, %s95
      %p107 = scmp.eq.s32.totalorder %s22, 1
      %p108 = por %p106, %p107
      %p110 = scmp.ne.s32.totalorder %s95, %s109
      %p111 = scmp.eq.s32.totalorder %s22, 0
      %p112 = por %p110, %p111
      %s114 = sadd.s32 %s113, 1
      %p117 = scmp.eq.s32.totalorder %s16, 1
      %p118 = scmp.ne.s32.totalorder %s113, %s115
      %p119 = scmp.eq.s32.totalorder %s16, 0
      %p120 = por %p118, %p119
      %p121 = scmp.ne.s32.totalorder %s113, %s115
      %p122 = scmp.eq.s32.totalorder %s21, 1
      %p123 = por %p121, %p122
      %p124 = scmp.ne.s32.totalorder %s115, %s116
      %p125 = scmp.eq.s32.totalorder %s21, 0
      %p126 = por %p124, %p125
      %p127 = scmp.ne.s32.totalorder %s115, %s116
      %p128 = scmp.eq.s32.totalorder %s22, 1
      %p129 = por %p127, %p128
      %p131 = scmp.ne.s32.totalorder %s116, %s130
      %p132 = scmp.eq.s32.totalorder %s22, 0
      %p133 = por %p131, %p132
      %s135 = sadd.s32 %s134, 1
      %p138 = scmp.eq.s32.totalorder %s16, 1
      %p139 = scmp.ne.s32.totalorder %s134, %s136
      %p140 = scmp.eq.s32.totalorder %s16, 0
      %p141 = por %p139, %p140
      %p142 = scmp.ne.s32.totalorder %s134, %s136
      %p143 = scmp.eq.s32.totalorder %s21, 1
      %p144 = por %p142, %p143
      %p145 = scmp.ne.s32.totalorder %s136, %s137
      %p146 = scmp.eq.s32.totalorder %s21, 0
      %p147 = por %p145, %p146
      %p148 = scmp.ne.s32.totalorder %s136, %s137
      %p149 = scmp.eq.s32.totalorder %s22, 1
      %p150 = por %p148, %p149
      %p152 = scmp.ne.s32.totalorder %s137, %s151
      %p153 = scmp.eq.s32.totalorder %s22, 0
      %p154 = por %p152, %p153
      %s156 = sadd.s32 %s155, 1
      %p159 = scmp.eq.s32.totalorder %s16, 1
      %p160 = scmp.ne.s32.totalorder %s155, %s157
      %p161 = scmp.eq.s32.totalorder %s16, 0
      %p162 = por %p160, %p161
      %p163 = scmp.ne.s32.totalorder %s155, %s157
      %p164 = scmp.eq.s32.totalorder %s21, 1
      %p165 = por %p163, %p164
      %p166 = scmp.ne.s32.totalorder %s157, %s158
      %p167 = scmp.eq.s32.totalorder %s21, 0
      %p168 = por %p166, %p167
      %p169 = scmp.ne.s32.totalorder %s157, %s158
      %p170 = scmp.eq.s32.totalorder %s22, 1
      %p171 = por %p169, %p170
      %p173 = scmp.ne.s32.totalorder %s158, %s172
      %p174 = scmp.eq.s32.totalorder %s22, 0
      %p175 = por %p173, %p174
      %s176 = ssub.s32 %s16, %s23
      %p177 = scmp.eq.s32.totalorder %s176, 0
      %s179 = sadd.s32 %s178, 1
      %s180 = scalar_select %p177, %s178, %s179
      %p183 = pneg %p177
      %p184 = scmp.eq.s32.totalorder %s16, 1
      %p185 = por %p183, %p184
      %p186 = scmp.ne.s32.totalorder %s178, %s181
      %p187 = scmp.eq.s32.totalorder %s16, 0
      %p188 = por %p186, %p187
      %p189 = scmp.ne.s32.totalorder %s178, %s181
      %p190 = scmp.eq.s32.totalorder %s21, 1
      %p191 = por %p189, %p190
      %p192 = scmp.ne.s32.totalorder %s181, %s182
      %p193 = scmp.eq.s32.totalorder %s21, 0
      %p194 = por %p192, %p193
      %p195 = scmp.ne.s32.totalorder %s181, %s182
      %p196 = scmp.eq.s32.totalorder %s22, 1
      %p197 = por %p195, %p196
      %p199 = scmp.ne.s32.totalorder %s182, %s198
      %p200 = scmp.eq.s32.totalorder %s22, 0
      %p201 = por %p199, %p200
      %p202 = scmp.le.s32.totalorder 1, %s16
      %p203 = scmp.lt.s32.totalorder %s16, 3
      %p204 = pnand %p202, %p203
      %p205 = pneg %p204
      // Predicated region
      $region9: #{fourier_unit.5} parent=5 // pred_check
        _
      $region10: #{fourier_unit.5} parent=5 // pred_check_branch
        %207 = sbr.rel (%p204) target = $region12
      $region11: #{fourier_unit.5} parent=5 // pred_region
        %s208 = ssub.s32 %s16, 1
        // Predicated region
        $region13: #{fourier_unit.5} parent=11 // pred_check
          %p209 = pneg %p63
        $region14: #{fourier_unit.5} parent=11 // pred_check_branch
          %211 = sbr.rel (%p209) target = $region16
        $region15: #{fourier_unit.5} parent=11 // pred_region
          _
        $region16: #{fourier_unit.5} parent=11 // pred_fallthru
          _
        // Predicated region
        $region17: #{fourier_unit.5} parent=11 // pred_check
          %p212 = pneg %p84
        $region18: #{fourier_unit.5} parent=11 // pred_check_branch
          %214 = sbr.rel (%p212) target = $region20
        $region19: #{fourier_unit.5} parent=11 // pred_region
          _
        $region20: #{fourier_unit.5} parent=11 // pred_fallthru
          _
        // Predicated region
        $region21: #{fourier_unit.5} parent=11 // pred_check
          %p215 = pneg %p105
        $region22: #{fourier_unit.5} parent=11 // pred_check_branch
          %217 = sbr.rel (%p215) target = $region24
        $region23: #{fourier_unit.5} parent=11 // pred_region
          _
        $region24: #{fourier_unit.5} parent=11 // pred_fallthru
          _
        // Predicated region
        $region25: #{fourier_unit.5} parent=11 // pred_check
          %p218 = pneg %p126
        $region26: #{fourier_unit.5} parent=11 // pred_check_branch
          %220 = sbr.rel (%p218) target = $region28
        $region27: #{fourier_unit.5} parent=11 // pred_region
          _
        $region28: #{fourier_unit.5} parent=11 // pred_fallthru
          _
        // Predicated region
        $region29: #{fourier_unit.5} parent=11 // pred_check
          %p221 = pneg %p147
        $region30: #{fourier_unit.5} parent=11 // pred_check_branch
          %223 = sbr.rel (%p221) target = $region32
        $region31: #{fourier_unit.5} parent=11 // pred_region
          _
        $region32: #{fourier_unit.5} parent=11 // pred_fallthru
          _
        // Predicated region
        $region33: #{fourier_unit.5} parent=11 // pred_check
          %p224 = pneg %p168
        $region34: #{fourier_unit.5} parent=11 // pred_check_branch
          %226 = sbr.rel (%p224) target = $region36
        $region35: #{fourier_unit.5} parent=11 // pred_region
          _
        $region36: #{fourier_unit.5} parent=11 // pred_fallthru
          _
      $region12: #{fourier_unit.5} parent=5 // pred_fallthru
        _
      %p227 = scmp.lt.s32.totalorder %s16, 2
      // Predicated region
      $region37: #{fourier_unit.5} parent=5 // pred_check
        %p228 = pneg %p227
      $region38: #{fourier_unit.5} parent=5 // pred_check_branch
        %230 = sbr.rel (%p228) target = $region40
      $region39: #{fourier_unit.5} parent=5 // pred_region
        // Predicated region
        $region41: #{fourier_unit.5} parent=39 // pred_check
          %p231 = pneg %p36
        $region42: #{fourier_unit.5} parent=39 // pred_check_branch
          %233 = sbr.rel (%p231) target = $region44
        $region43: #{fourier_unit.5} parent=39 // pred_region
          %p234 = scmp.lt.s32.totalorder %s16, 1
          %s235 = scalar_select %p234, %s16, 1
          %s236 = smul.addr %s235, 16
          %s237 = smul.addr %s236, 8
          %s238 = scalar_lea.vmem %s0, %s237
        $region44: #{fourier_unit.5} parent=39 // pred_fallthru
          _
      $region40: #{fourier_unit.5} parent=5 // pred_fallthru
        _
      %p239 = scmp.le.s32.totalorder 1, %s16
      %p240 = scmp.lt.s32.totalorder %s16, 3
      %p241 = pnand %p239, %p240
      %p242 = pneg %p241
      // Predicated region
      $region45: #{fourier_unit.5} parent=5 // pred_check
        _
      $region46: #{fourier_unit.5} parent=5 // pred_check_branch
        %244 = sbr.rel (%p241) target = $region48
      $region47: #{fourier_unit.5} parent=5 // pred_region
        %s245 = ssub.s32 %s16, 1
        %p246 = scmp.lt.s32.totalorder %s21, 1
        %s247 = scalar_select %p246, %s21, 1
        %s248 = smul.addr %s247, 16
        %s249 = smul.addr %s248, 8
        %s250 = scalar_lea.vmem %s0, %s249
        %p251 = pneg %p42
        %p252 = pneg %p39
        %p253 = pneg %p63
        %p254 = pneg %p60
        %p255 = pneg %p84
        %p256 = pneg %p81
        %p257 = pneg %p105
        %p258 = pneg %p102
        %p259 = pneg %p126
        %p260 = pneg %p123
        %p261 = pneg %p147
        %p262 = pneg %p144
        %p263 = pneg %p168
        %p264 = pneg %p165
        %p265 = pneg %p194
        %p266 = pneg %p191
        %s267 = sand.u32 %s181, 1
        %s268 = scalar_lea.sflag [#allocation3], %s267
        %s269 = sand.u32 %s181, 1
        %s270 = smul.addr %s269, 64
        %s271 = scalar_lea.vmem [#allocation2], %s270
        %p272 = scmp.lt.s32.totalorder %s21, 1
        %s273 = scalar_select %p272, %s21, 1
        %s274 = smul.addr %s273, 16
        %s275 = smul.addr %s274, 8
        %s276 = scalar_lea.vmem %s0, %s275
        %v278 = vld [vmem:[%s276] sm:$0xff]
        %v279 = vld [vmem:[%s276 + $0x8] sm:$0xff]
        %v280 = vld [vmem:[%s276 + $0x10] sm:$0xff]
        %v281 = vld [vmem:[%s276 + $0x18] sm:$0xff]
        %v282 = vld [vmem:[%s276 + $0x20] sm:$0xff]
        %v283 = vld [vmem:[%s276 + $0x28] sm:$0xff]
        %v284 = vld [vmem:[%s276 + $0x30] sm:$0xff]
        %v285 = vld [vmem:[%s276 + $0x38] sm:$0xff]
        %v286 = vld [vmem:[%s276 + $0x40] sm:$0xff]
        %v287 = vld [vmem:[%s276 + $0x48] sm:$0xff]
        %v288 = vld [vmem:[%s276 + $0x50] sm:$0xff]
        %v289 = vld [vmem:[%s276 + $0x58] sm:$0xff]
        %v290 = vld [vmem:[%s276 + $0x60] sm:$0xff]
        %v291 = vld [vmem:[%s276 + $0x68] sm:$0xff]
        %v292 = vld [vmem:[%s276 + $0x70] sm:$0xff]
        %v293 = vld [vmem:[%s276 + $0x78] sm:$0xff]
        %v294 = vld [vmem:[%s1] sm:$0x1]
        %v295 = vld [vmem:[%s1 + $0x1] sm:$0x1]
        %v296 = vld [vmem:[%s1 + $0x2] sm:$0x1]
        %v297 = vld [vmem:[%s1 + $0x3] sm:$0x1]
        %v298 = vld [vmem:[%s1 + $0x4] sm:$0x1]
        %v299 = vld [vmem:[%s1 + $0x5] sm:$0x1]
        %v300 = vld [vmem:[%s1 + $0x6] sm:$0x1]
        %v301 = vld [vmem:[%s1 + $0x7] sm:$0x1]
        %v310 = vlaneseq
        %v311 = vshrl.u32 %v310, 7
        %v312 = vsub.s32 0, %v311
        %v313 = vrot.slane %v294, %v312
        %v314 = vlaneseq
        %v315 = vshrl.u32 %v314, 7
        %v316 = vsub.s32 0, %v315
        %v317 = vrot.slane %v295, %v316
        %v318 = vlaneseq
        %v319 = vshrl.u32 %v318, 7
        %v320 = vsub.s32 0, %v319
        %v321 = vrot.slane %v296, %v320
        %v322 = vlaneseq
        %v323 = vshrl.u32 %v322, 7
        %v324 = vsub.s32 0, %v323
        %v325 = vrot.slane %v297, %v324
        %v326 = vlaneseq
        %v327 = vshrl.u32 %v326, 7
        %v328 = vsub.s32 0, %v327
        %v329 = vrot.slane %v298, %v328
        %v330 = vlaneseq
        %v331 = vshrl.u32 %v330, 7
        %v332 = vsub.s32 0, %v331
        %v333 = vrot.slane %v299, %v332
        %v334 = vlaneseq
        %v335 = vshrl.u32 %v334, 7
        %v336 = vsub.s32 0, %v335
        %v337 = vrot.slane %v300, %v336
        %v338 = vlaneseq
        %v339 = vshrl.u32 %v338, 7
        %v340 = vsub.s32 0, %v339
        %v341 = vrot.slane %v301, %v340
        %342 = vset.pattern.permute.xlu0 0
        %343 = vperm.xlu0 %342, %v313
        %v344 = vpop.permute.xlu0 %343
        %346 = vset.pattern.permute.xlu0 0
        %347 = vperm.xlu0 %346, %v317
        %v348 = vpop.permute.xlu0 %347
        %350 = vset.pattern.permute.xlu0 0
        %351 = vperm.xlu0 %350, %v321
        %v352 = vpop.permute.xlu0 %351
        %354 = vset.pattern.permute.xlu0 0
        %355 = vperm.xlu0 %354, %v325
        %v356 = vpop.permute.xlu0 %355
        %358 = vset.pattern.permute.xlu0 0
        %359 = vperm.xlu0 %358, %v329
        %v360 = vpop.permute.xlu0 %359
        %362 = vset.pattern.permute.xlu0 0
        %363 = vperm.xlu0 %362, %v333
        %v364 = vpop.permute.xlu0 %363
        %366 = vset.pattern.permute.xlu0 0
        %367 = vperm.xlu0 %366, %v337
        %v368 = vpop.permute.xlu0 %367
        %370 = vset.pattern.permute.xlu0 0
        %371 = vperm.xlu0 %370, %v341
        %v372 = vpop.permute.xlu0 %371
        %v374 = vmul.f32 %v278, %v344
        %v375 = vmul.f32 %v279, %v344
        %v376 = vmul.f32 %v280, %v348
        %v377 = vmul.f32 %v281, %v348
        %v378 = vmul.f32 %v282, %v352
        %v379 = vmul.f32 %v283, %v352
        %v380 = vmul.f32 %v284, %v356
        %v381 = vmul.f32 %v285, %v356
        %v382 = vmul.f32 %v286, %v360
        %v383 = vmul.f32 %v287, %v360
        %v384 = vmul.f32 %v288, %v364
        %v385 = vmul.f32 %v289, %v364
        %v386 = vmul.f32 %v290, %v368
        %v387 = vmul.f32 %v291, %v368
        %v388 = vmul.f32 %v292, %v372
        %v389 = vmul.f32 %v293, %v372
        %v390 = vld [vmem:[%s2] sm:$0x1]
        %v391 = vld [vmem:[%s2 + $0x1] sm:$0x1]
        %v392 = vld [vmem:[%s2 + $0x2] sm:$0x1]
        %v393 = vld [vmem:[%s2 + $0x3] sm:$0x1]
        %v394 = vld [vmem:[%s2 + $0x4] sm:$0x1]
        %v395 = vld [vmem:[%s2 + $0x5] sm:$0x1]
        %v396 = vld [vmem:[%s2 + $0x6] sm:$0x1]
        %v397 = vld [vmem:[%s2 + $0x7] sm:$0x1]
        %v406 = vlaneseq
        %v407 = vshrl.u32 %v406, 7
        %v408 = vsub.s32 0, %v407
        %v409 = vrot.slane %v390, %v408
        %v410 = vlaneseq
        %v411 = vshrl.u32 %v410, 7
        %v412 = vsub.s32 0, %v411
        %v413 = vrot.slane %v391, %v412
        %v414 = vlaneseq
        %v415 = vshrl.u32 %v414, 7
        %v416 = vsub.s32 0, %v415
        %v417 = vrot.slane %v392, %v416
        %v418 = vlaneseq
        %v419 = vshrl.u32 %v418, 7
        %v420 = vsub.s32 0, %v419
        %v421 = vrot.slane %v393, %v420
        %v422 = vlaneseq
        %v423 = vshrl.u32 %v422, 7
        %v424 = vsub.s32 0, %v423
        %v425 = vrot.slane %v394, %v424
        %v426 = vlaneseq
        %v427 = vshrl.u32 %v426, 7
        %v428 = vsub.s32 0, %v427
        %v429 = vrot.slane %v395, %v428
        %v430 = vlaneseq
        %v431 = vshrl.u32 %v430, 7
        %v432 = vsub.s32 0, %v431
        %v433 = vrot.slane %v396, %v432
        %v434 = vlaneseq
        %v435 = vshrl.u32 %v434, 7
        %v436 = vsub.s32 0, %v435
        %v437 = vrot.slane %v397, %v436
        %438 = vset.pattern.permute.xlu0 0
        %439 = vperm.xlu0 %438, %v409
        %v440 = vpop.permute.xlu0 %439
        %442 = vset.pattern.permute.xlu0 0
        %443 = vperm.xlu0 %442, %v413
        %v444 = vpop.permute.xlu0 %443
        %446 = vset.pattern.permute.xlu0 0
        %447 = vperm.xlu0 %446, %v417
        %v448 = vpop.permute.xlu0 %447
        %450 = vset.pattern.permute.xlu0 0
        %451 = vperm.xlu0 %450, %v421
        %v452 = vpop.permute.xlu0 %451
        %454 = vset.pattern.permute.xlu0 0
        %455 = vperm.xlu0 %454, %v425
        %v456 = vpop.permute.xlu0 %455
        %458 = vset.pattern.permute.xlu0 0
        %459 = vperm.xlu0 %458, %v429
        %v460 = vpop.permute.xlu0 %459
        %462 = vset.pattern.permute.xlu0 0
        %463 = vperm.xlu0 %462, %v433
        %v464 = vpop.permute.xlu0 %463
        %466 = vset.pattern.permute.xlu0 0
        %467 = vperm.xlu0 %466, %v437
        %v468 = vpop.permute.xlu0 %467
        %v470 = vadd.f32 %v374, %v440
        %v471 = vadd.f32 %v375, %v440
        %v472 = vadd.f32 %v376, %v444
        %v473 = vadd.f32 %v377, %v444
        %v474 = vadd.f32 %v378, %v448
        %v475 = vadd.f32 %v379, %v448
        %v476 = vadd.f32 %v380, %v452
        %v477 = vadd.f32 %v381, %v452
        %v478 = vadd.f32 %v382, %v456
        %v479 = vadd.f32 %v383, %v456
        %v480 = vadd.f32 %v384, %v460
        %v481 = vadd.f32 %v385, %v460
        %v482 = vadd.f32 %v386, %v464
        %v483 = vadd.f32 %v387, %v464
        %v484 = vadd.f32 %v388, %v468
        %v485 = vadd.f32 %v389, %v468
        %v486 = vmax.f32 %v470, 0.0
        %v487 = vmax.f32 %v471, 0.0
        %v488 = vmax.f32 %v472, 0.0
        %v489 = vmax.f32 %v473, 0.0
        %v490 = vmax.f32 %v474, 0.0
        %v491 = vmax.f32 %v475, 0.0
        %v492 = vmax.f32 %v476, 0.0
        %v493 = vmax.f32 %v477, 0.0
        %v494 = vmax.f32 %v478, 0.0
        %v495 = vmax.f32 %v479, 0.0
        %v496 = vmax.f32 %v480, 0.0
        %v497 = vmax.f32 %v481, 0.0
        %v498 = vmax.f32 %v482, 0.0
        %v499 = vmax.f32 %v483, 0.0
        %v500 = vmax.f32 %v484, 0.0
        %v501 = vmax.f32 %v485, 0.0
        %v502 = vpack.c.bf16 %v487, %v486
        %v503 = vpack.c.bf16 %v489, %v488
        %v504 = vpack.c.bf16 %v491, %v490
        %v505 = vpack.c.bf16 %v493, %v492
        %v506 = vpack.c.bf16 %v495, %v494
        %v507 = vpack.c.bf16 %v497, %v496
        %v508 = vpack.c.bf16 %v499, %v498
        %v509 = vpack.c.bf16 %v501, %v500
        %v510 = vld [vmem:[%s5] sm:$0xf]
        %v511 = vld [vmem:[%s5 + $0x4] sm:$0xf]
        %v514 = vunpack.c.l.b16 %v510
        %v515 = vunpack.c.l.b16 %v511
        %v516 = vpack.c.b16 %v515, %v514
        %vm518 = vcmask 130048
        %v520 = vsel %vm518, %v502, 0
        %v523 = vsel %vm518, %v503, 0
        %v526 = vsel %vm518, %v504, 0
        %v529 = vsel %vm518, %v505, 0
        %v532 = vsel %vm518, %v506, 0
        %v535 = vsel %vm518, %v507, 0
        %v538 = vsel %vm518, %v508, 0
        %v541 = vsel %vm518, %v509, 0
        %543 = vmatprep.subr.bf16.mxu0 0
        %544 = vmatpush1.bf16.msra.mxu0 %v516
        %545 = vmatprep.subr.bf16.mxu0 0
        %546 = vmatpush1.bf16.msra.mxu0 0
        %547 = vmatprep.subr.bf16.mxu0 0
        %548 = vmatpush1.bf16.msra.mxu0 0
        %549 = vmatprep.subr.bf16.mxu0 0
        %550 = vmatpush1.bf16.msra.mxu0 0
        %551 = vmatprep.subr.bf16.mxu0 0
        %552 = vmatpush1.bf16.msra.mxu0 0
        %553 = vmatprep.subr.bf16.mxu0 0
        %554 = vmatpush1.bf16.msra.mxu0 0
        %555 = vmatprep.subr.bf16.mxu0 0
        %556 = vmatpush1.bf16.msra.mxu0 0
        %557 = vmatprep.subr.bf16.mxu0 0
        %558 = vmatpush1.bf16.msra.mxu0 0
        %559 = vmatprep.subr.bf16.mxu0 0
        %560 = vmatpush1.bf16.msra.mxu0 0
        %561 = vmatprep.subr.bf16.mxu0 0
        %562 = vmatpush1.bf16.msra.mxu0 0
        %563 = vmatprep.subr.bf16.mxu0 0
        %564 = vmatpush1.bf16.msra.mxu0 0
        %565 = vmatprep.subr.bf16.mxu0 0
        %566 = vmatpush1.bf16.msra.mxu0 0
        %567 = vmatprep.subr.bf16.mxu0 0
        %568 = vmatpush1.bf16.msra.mxu0 0
        %569 = vmatprep.subr.bf16.mxu0 0
        %570 = vmatpush1.bf16.msra.mxu0 0
        %571 = vmatprep.subr.bf16.mxu0 0
        %572 = vmatpush1.bf16.msra.mxu0 0
        %573 = vmatprep.subr.bf16.mxu0 0
        %574 = vmatpush1.bf16.msra.mxu0 0
        %575 = vmatprep.mubr.bf16.mxu0 0
        %576 = vmatmul.mubr.bf16.gmra.mrb[0].mxu0 %v520
        %v577 = vpop.f32.mrb[0].mxu0
        %v578 = vadd.f32 0.0, %v577
        %v579 = vpop.f32.mrb[0].mxu0
        %v580 = vpop.f32.mrb[0].mxu0
        %v581 = vadd.f32 0.0, %v580
        %v582 = vpop.f32.mrb[0].mxu0
        %583 = vmatprep.mubr.bf16.mxu0 0
        %584 = vmatmul.mubr.bf16.gmra.mrb[0].mxu0 %v523
        %v585 = vpop.f32.mrb[0].mxu0
        %v586 = vadd.f32 0.0, %v585
        %v587 = vpop.f32.mrb[0].mxu0
        %v588 = vpop.f32.mrb[0].mxu0
        %v589 = vadd.f32 0.0, %v588
        %v590 = vpop.f32.mrb[0].mxu0
        %591 = vmatprep.mubr.bf16.mxu0 0
        %592 = vmatmul.mubr.bf16.gmra.mrb[0].mxu0 %v526
        %v593 = vpop.f32.mrb[0].mxu0
        %v594 = vadd.f32 0.0, %v593
        %v595 = vpop.f32.mrb[0].mxu0
        %v596 = vpop.f32.mrb[0].mxu0
        %v597 = vadd.f32 0.0, %v596
        %v598 = vpop.f32.mrb[0].mxu0
        %599 = vmatprep.mubr.bf16.mxu0 0
        %600 = vmatmul.mubr.bf16.gmra.mrb[0].mxu0 %v529
        %v601 = vpop.f32.mrb[0].mxu0
        %v602 = vadd.f32 0.0, %v601
        %v603 = vpop.f32.mrb[0].mxu0
        %v604 = vpop.f32.mrb[0].mxu0
        %v605 = vadd.f32 0.0, %v604
        %v606 = vpop.f32.mrb[0].mxu0
        %607 = vmatprep.mubr.bf16.mxu0 0
        %608 = vmatmul.mubr.bf16.gmra.mrb[0].mxu0 %v532
        %v609 = vpop.f32.mrb[0].mxu0
        %v610 = vadd.f32 0.0, %v609
        %v611 = vpop.f32.mrb[0].mxu0
        %v612 = vpop.f32.mrb[0].mxu0
        %v613 = vadd.f32 0.0, %v612
        %v614 = vpop.f32.mrb[0].mxu0
        %615 = vmatprep.mubr.bf16.mxu0 0
        %616 = vmatmul.mubr.bf16.gmra.mrb[0].mxu0 %v535
        %v617 = vpop.f32.mrb[0].mxu0
        %v618 = vadd.f32 0.0, %v617
        %v619 = vpop.f32.mrb[0].mxu0
        %v620 = vpop.f32.mrb[0].mxu0
        %v621 = vadd.f32 0.0, %v620
        %v622 = vpop.f32.mrb[0].mxu0
        %623 = vmatprep.mubr.bf16.mxu0 0
        %624 = vmatmul.mubr.bf16.gmra.mrb[0].mxu0 %v538
        %v625 = vpop.f32.mrb[0].mxu0
        %v626 = vadd.f32 0.0, %v625
        %v627 = vpop.f32.mrb[0].mxu0
        %v628 = vpop.f32.mrb[0].mxu0
        %v629 = vadd.f32 0.0, %v628
        %v630 = vpop.f32.mrb[0].mxu0
        %631 = vmatprep.mubr.bf16.mxu0 0
        %632 = vmatmul.mubr.bf16.gmra.mrb[0].mxu0 %v541
        %v633 = vpop.f32.mrb[0].mxu0
        %v634 = vadd.f32 0.0, %v633
        %v635 = vpop.f32.mrb[0].mxu0
        %v636 = vpop.f32.mrb[0].mxu0
        %v637 = vadd.f32 0.0, %v636
        %v638 = vpop.f32.mrb[0].mxu0
        %639 = vdwg.mxu0
        %v640 = vld [vmem:[%s6] sm:$0xf]
        %v641 = vld [vmem:[%s6 + $0x4] sm:$0xf]
        %v644 = vunpack.c.l.b16 %v640
        %v645 = vunpack.c.l.b16 %v641
        %v646 = vpack.c.b16 %v645, %v644
        %648 = vmatprep.subr.bf16.mxu0 0
        %649 = vmatpush1.bf16.msra.mxu0 %v646
        %650 = vmatprep.subr.bf16.mxu0 0
        %651 = vmatpush1.bf16.msra.mxu0 0
        %652 = vmatprep.subr.bf16.mxu0 0
        %653 = vmatpush1.bf16.msra.mxu0 0
        %654 = vmatprep.subr.bf16.mxu0 0
        %655 = vmatpush1.bf16.msra.mxu0 0
        %656 = vmatprep.subr.bf16.mxu0 0
        %657 = vmatpush1.bf16.msra.mxu0 0
        %658 = vmatprep.subr.bf16.mxu0 0
        %659 = vmatpush1.bf16.msra.mxu0 0
        %660 = vmatprep.subr.bf16.mxu0 0
        %661 = vmatpush1.bf16.msra.mxu0 0
        %662 = vmatprep.subr.bf16.mxu0 0
        %663 = vmatpush1.bf16.msra.mxu0 0
        %664 = vmatprep.subr.bf16.mxu0 0
        %665 = vmatpush1.bf16.msra.mxu0 0
        %666 = vmatprep.subr.bf16.mxu0 0
        %667 = vmatpush1.bf16.msra.mxu0 0
        %668 = vmatprep.subr.bf16.mxu0 0
        %669 = vmatpush1.bf16.msra.mxu0 0
        %670 = vmatprep.subr.bf16.mxu0 0
        %671 = vmatpush1.bf16.msra.mxu0 0
        %672 = vmatprep.subr.bf16.mxu0 0
        %673 = vmatpush1.bf16.msra.mxu0 0
        %674 = vmatprep.subr.bf16.mxu0 0
        %675 = vmatpush1.bf16.msra.mxu0 0
        %676 = vmatprep.subr.bf16.mxu0 0
        %677 = vmatpush1.bf16.msra.mxu0 0
        %678 = vmatprep.subr.bf16.mxu0 0
        %679 = vmatpush1.bf16.msra.mxu0 0
        %680 = vmatprep.mubr.bf16.mxu0 0
        %681 = vmatmul.mubr.bf16.gmra.mrb[0].mxu0 %v520
        %v682 = vpop.f32.mrb[0].mxu0
        %v683 = vadd.f32 0.0, %v682
        %v684 = vpop.f32.mrb[0].mxu0
        %v685 = vpop.f32.mrb[0].mxu0
        %v686 = vadd.f32 0.0, %v685
        %v687 = vpop.f32.mrb[0].mxu0
        %688 = vmatprep.mubr.bf16.mxu0 0
        %689 = vmatmul.mubr.bf16.gmra.mrb[0].mxu0 %v523
        %v690 = vpop.f32.mrb[0].mxu0
        %v691 = vadd.f32 0.0, %v690
        %v692 = vpop.f32.mrb[0].mxu0
        %v693 = vpop.f32.mrb[0].mxu0
        %v694 = vadd.f32 0.0, %v693
        %v695 = vpop.f32.mrb[0].mxu0
        %696 = vmatprep.mubr.bf16.mxu0 0
        %697 = vmatmul.mubr.bf16.gmra.mrb[0].mxu0 %v526
        %v698 = vpop.f32.mrb[0].mxu0
        %v699 = vadd.f32 0.0, %v698
        %v700 = vpop.f32.mrb[0].mxu0
        %v701 = vpop.f32.mrb[0].mxu0
        %v702 = vadd.f32 0.0, %v701
        %v703 = vpop.f32.mrb[0].mxu0
        %704 = vmatprep.mubr.bf16.mxu0 0
        %705 = vmatmul.mubr.bf16.gmra.mrb[0].mxu0 %v529
        %v706 = vpop.f32.mrb[0].mxu0
        %v707 = vadd.f32 0.0, %v706
        %v708 = vpop.f32.mrb[0].mxu0
        %v709 = vpop.f32.mrb[0].mxu0
        %v710 = vadd.f32 0.0, %v709
        %v711 = vpop.f32.mrb[0].mxu0
        %712 = vmatprep.mubr.bf16.mxu0 0
        %713 = vmatmul.mubr.bf16.gmra.mrb[0].mxu0 %v532
        %v714 = vpop.f32.mrb[0].mxu0
        %v715 = vadd.f32 0.0, %v714
        %v716 = vpop.f32.mrb[0].mxu0
        %v717 = vpop.f32.mrb[0].mxu0
        %v718 = vadd.f32 0.0, %v717
        %v719 = vpop.f32.mrb[0].mxu0
        %720 = vmatprep.mubr.bf16.mxu0 0
        %721 = vmatmul.mubr.bf16.gmra.mrb[0].mxu0 %v535
        %v722 = vpop.f32.mrb[0].mxu0
        %v723 = vadd.f32 0.0, %v722
        %v724 = vpop.f32.mrb[0].mxu0
        %v725 = vpop.f32.mrb[0].mxu0
        %v726 = vadd.f32 0.0, %v725
        %v727 = vpop.f32.mrb[0].mxu0
        %728 = vmatprep.mubr.bf16.mxu0 0
        %729 = vmatmul.mubr.bf16.gmra.mrb[0].mxu0 %v538
        %v730 = vpop.f32.mrb[0].mxu0
        %v731 = vadd.f32 0.0, %v730
        %v732 = vpop.f32.mrb[0].mxu0
        %v733 = vpop.f32.mrb[0].mxu0
        %v734 = vadd.f32 0.0, %v733
        %v735 = vpop.f32.mrb[0].mxu0
        %736 = vmatprep.mubr.bf16.mxu0 0
        %737 = vmatmul.mubr.bf16.gmra.mrb[0].mxu0 %v541
        %v738 = vpop.f32.mrb[0].mxu0
        %v739 = vadd.f32 0.0, %v738
        %v740 = vpop.f32.mrb[0].mxu0
        %v741 = vpop.f32.mrb[0].mxu0
        %v742 = vadd.f32 0.0, %v741
        %v743 = vpop.f32.mrb[0].mxu0
        %744 = vdwg.mxu0
        %v745 = vadd.f32 %v578, %v715
        %v746 = vadd.f32 %v581, %v718
        %v747 = vadd.f32 %v586, %v723
        %v748 = vadd.f32 %v589, %v726
        %v749 = vadd.f32 %v594, %v731
        %v750 = vadd.f32 %v597, %v734
        %v751 = vadd.f32 %v602, %v739
        %v752 = vadd.f32 %v605, %v742
        %v753 = vsub.f32 %v610, %v683
        %v754 = vsub.f32 %v613, %v686
        %v755 = vsub.f32 %v618, %v691
        %v756 = vsub.f32 %v621, %v694
        %v757 = vsub.f32 %v626, %v699
        %v758 = vsub.f32 %v629, %v702
        %v759 = vsub.f32 %v634, %v707
        %v760 = vsub.f32 %v637, %v710
        %761 = vxpose.xlu0.b32.start [1/16] %v745, 128
        %762 = vxpose.xlu0.b32.cont [2/16] %v746, 128
        %763 = vxpose.xlu0.b32.cont [3/16] 0.0, 128
        %764 = vxpose.xlu0.b32.cont [4/16] 0.0, 128
        %765 = vxpose.xlu0.b32.cont [5/16] 0.0, 128
        %766 = vxpose.xlu0.b32.cont [6/16] 0.0, 128
        %767 = vxpose.xlu0.b32.cont [7/16] 0.0, 128
        %768 = vxpose.xlu0.b32.cont [8/16] 0.0, 128
        %769 = vxpose.xlu0.b32.cont [9/16] 0.0, 128
        %770 = vxpose.xlu0.b32.cont [10/16] 0.0, 128
        %771 = vxpose.xlu0.b32.cont [11/16] 0.0, 128
        %772 = vxpose.xlu0.b32.cont [12/16] 0.0, 128
        %773 = vxpose.xlu0.b32.cont [13/16] 0.0, 128
        %774 = vxpose.xlu0.b32.cont [14/16] 0.0, 128
        %775 = vxpose.xlu0.b32.cont [15/16] 0.0, 128
        %776 = vxpose.xlu0.b32.end [16/16] 0.0, 128
        %v777 = vpop.trf.xlu0
        %v778 = vpop.trf.xlu0
        %v779 = vpop.trf.xlu0
        %v780 = vpop.trf.xlu0
        %v781 = vpop.trf.xlu0
        %v782 = vpop.trf.xlu0
        %v783 = vpop.trf.xlu0
        %v784 = vpop.trf.xlu0
        %v785 = vpop.trf.xlu0
        %v786 = vpop.trf.xlu0
        %v787 = vpop.trf.xlu0
        %v788 = vpop.trf.xlu0
        %v789 = vpop.trf.xlu0
        %v790 = vpop.trf.xlu0
        %v791 = vpop.trf.xlu0
        %v792 = vpop.trf.xlu0
        %793 = vxpose.xlu0.b32.start [1/16] %v747, 128
        %794 = vxpose.xlu0.b32.cont [2/16] %v748, 128
        %795 = vxpose.xlu0.b32.cont [3/16] 0.0, 128
        %796 = vxpose.xlu0.b32.cont [4/16] 0.0, 128
        %797 = vxpose.xlu0.b32.cont [5/16] 0.0, 128
        %798 = vxpose.xlu0.b32.cont [6/16] 0.0, 128
        %799 = vxpose.xlu0.b32.cont [7/16] 0.0, 128
        %800 = vxpose.xlu0.b32.cont [8/16] 0.0, 128
        %801 = vxpose.xlu0.b32.cont [9/16] 0.0, 128
        %802 = vxpose.xlu0.b32.cont [10/16] 0.0, 128
        %803 = vxpose.xlu0.b32.cont [11/16] 0.0, 128
        %804 = vxpose.xlu0.b32.cont [12/16] 0.0, 128
        %805 = vxpose.xlu0.b32.cont [13/16] 0.0, 128
        %806 = vxpose.xlu0.b32.cont [14/16] 0.0, 128
        %807 = vxpose.xlu0.b32.cont [15/16] 0.0, 128
        %808 = vxpose.xlu0.b32.end [16/16] 0.0, 128
        %v809 = vpop.trf.xlu0
        %v810 = vpop.trf.xlu0
        %v811 = vpop.trf.xlu0
        %v812 = vpop.trf.xlu0
        %v813 = vpop.trf.xlu0
        %v814 = vpop.trf.xlu0
        %v815 = vpop.trf.xlu0
        %v816 = vpop.trf.xlu0
        %v817 = vpop.trf.xlu0
        %v818 = vpop.trf.xlu0
        %v819 = vpop.trf.xlu0
        %v820 = vpop.trf.xlu0
        %v821 = vpop.trf.xlu0
        %v822 = vpop.trf.xlu0
        %v823 = vpop.trf.xlu0
        %v824 = vpop.trf.xlu0
        %825 = vxpose.xlu0.b32.start [1/16] %v749, 128
        %826 = vxpose.xlu0.b32.cont [2/16] %v750, 128
        %827 = vxpose.xlu0.b32.cont [3/16] 0.0, 128
        %828 = vxpose.xlu0.b32.cont [4/16] 0.0, 128
        %829 = vxpose.xlu0.b32.cont [5/16] 0.0, 128
        %830 = vxpose.xlu0.b32.cont [6/16] 0.0, 128
        %831 = vxpose.xlu0.b32.cont [7/16] 0.0, 128
        %832 = vxpose.xlu0.b32.cont [8/16] 0.0, 128
        %833 = vxpose.xlu0.b32.cont [9/16] 0.0, 128
        %834 = vxpose.xlu0.b32.cont [10/16] 0.0, 128
        %835 = vxpose.xlu0.b32.cont [11/16] 0.0, 128
        %836 = vxpose.xlu0.b32.cont [12/16] 0.0, 128
        %837 = vxpose.xlu0.b32.cont [13/16] 0.0, 128
        %838 = vxpose.xlu0.b32.cont [14/16] 0.0, 128
        %839 = vxpose.xlu0.b32.cont [15/16] 0.0, 128
        %840 = vxpose.xlu0.b32.end [16/16] 0.0, 128
        %v841 = vpop.trf.xlu0
        %v842 = vpop.trf.xlu0
        %v843 = vpop.trf.xlu0
        %v844 = vpop.trf.xlu0
        %v845 = vpop.trf.xlu0
        %v846 = vpop.trf.xlu0
        %v847 = vpop.trf.xlu0
        %v848 = vpop.trf.xlu0
        %v849 = vpop.trf.xlu0
        %v850 = vpop.trf.xlu0
        %v851 = vpop.trf.xlu0
        %v852 = vpop.trf.xlu0
        %v853 = vpop.trf.xlu0
        %v854 = vpop.trf.xlu0
        %v855 = vpop.trf.xlu0
        %v856 = vpop.trf.xlu0
        %857 = vxpose.xlu0.b32.start [1/16] %v751, 128
        %858 = vxpose.xlu0.b32.cont [2/16] %v752, 128
        %859 = vxpose.xlu0.b32.cont [3/16] 0.0, 128
        %860 = vxpose.xlu0.b32.cont [4/16] 0.0, 128
        %861 = vxpose.xlu0.b32.cont [5/16] 0.0, 128
        %862 = vxpose.xlu0.b32.cont [6/16] 0.0, 128
        %863 = vxpose.xlu0.b32.cont [7/16] 0.0, 128
        %864 = vxpose.xlu0.b32.cont [8/16] 0.0, 128
        %865 = vxpose.xlu0.b32.cont [9/16] 0.0, 128
        %866 = vxpose.xlu0.b32.cont [10/16] 0.0, 128
        %867 = vxpose.xlu0.b32.cont [11/16] 0.0, 128
        %868 = vxpose.xlu0.b32.cont [12/16] 0.0, 128
        %869 = vxpose.xlu0.b32.cont [13/16] 0.0, 128
        %870 = vxpose.xlu0.b32.cont [14/16] 0.0, 128
        %871 = vxpose.xlu0.b32.cont [15/16] 0.0, 128
        %872 = vxpose.xlu0.b32.end [16/16] 0.0, 128
        %v873 = vpop.trf.xlu0
        %v874 = vpop.trf.xlu0
        %v875 = vpop.trf.xlu0
        %v876 = vpop.trf.xlu0
        %v877 = vpop.trf.xlu0
        %v878 = vpop.trf.xlu0
        %v879 = vpop.trf.xlu0
        %v880 = vpop.trf.xlu0
        %v881 = vpop.trf.xlu0
        %v882 = vpop.trf.xlu0
        %v883 = vpop.trf.xlu0
        %v884 = vpop.trf.xlu0
        %v885 = vpop.trf.xlu0
        %v886 = vpop.trf.xlu0
        %v887 = vpop.trf.xlu0
        %v888 = vpop.trf.xlu0
        %889 = vxpose.xlu0.b32.start [1/16] %v753, 128
        %890 = vxpose.xlu0.b32.cont [2/16] %v754, 128
        %891 = vxpose.xlu0.b32.cont [3/16] 0.0, 128
        %892 = vxpose.xlu0.b32.cont [4/16] 0.0, 128
        %893 = vxpose.xlu0.b32.cont [5/16] 0.0, 128
        %894 = vxpose.xlu0.b32.cont [6/16] 0.0, 128
        %895 = vxpose.xlu0.b32.cont [7/16] 0.0, 128
        %896 = vxpose.xlu0.b32.cont [8/16] 0.0, 128
        %897 = vxpose.xlu0.b32.cont [9/16] 0.0, 128
        %898 = vxpose.xlu0.b32.cont [10/16] 0.0, 128
        %899 = vxpose.xlu0.b32.cont [11/16] 0.0, 128
        %900 = vxpose.xlu0.b32.cont [12/16] 0.0, 128
        %901 = vxpose.xlu0.b32.cont [13/16] 0.0, 128
        %902 = vxpose.xlu0.b32.cont [14/16] 0.0, 128
        %903 = vxpose.xlu0.b32.cont [15/16] 0.0, 128
        %904 = vxpose.xlu0.b32.end [16/16] 0.0, 128
        %v905 = vpop.trf.xlu0
        %v906 = vpop.trf.xlu0
        %v907 = vpop.trf.xlu0
        %v908 = vpop.trf.xlu0
        %v909 = vpop.trf.xlu0
        %v910 = vpop.trf.xlu0
        %v911 = vpop.trf.xlu0
        %v912 = vpop.trf.xlu0
        %v913 = vpop.trf.xlu0
        %v914 = vpop.trf.xlu0
        %v915 = vpop.trf.xlu0
        %v916 = vpop.trf.xlu0
        %v917 = vpop.trf.xlu0
        %v918 = vpop.trf.xlu0
        %v919 = vpop.trf.xlu0
        %v920 = vpop.trf.xlu0
        %921 = vxpose.xlu0.b32.start [1/16] %v755, 128
        %922 = vxpose.xlu0.b32.cont [2/16] %v756, 128
        %923 = vxpose.xlu0.b32.cont [3/16] 0.0, 128
        %924 = vxpose.xlu0.b32.cont [4/16] 0.0, 128
        %925 = vxpose.xlu0.b32.cont [5/16] 0.0, 128
        %926 = vxpose.xlu0.b32.cont [6/16] 0.0, 128
        %927 = vxpose.xlu0.b32.cont [7/16] 0.0, 128
        %928 = vxpose.xlu0.b32.cont [8/16] 0.0, 128
        %929 = vxpose.xlu0.b32.cont [9/16] 0.0, 128
        %930 = vxpose.xlu0.b32.cont [10/16] 0.0, 128
        %931 = vxpose.xlu0.b32.cont [11/16] 0.0, 128
        %932 = vxpose.xlu0.b32.cont [12/16] 0.0, 128
        %933 = vxpose.xlu0.b32.cont [13/16] 0.0, 128
        %934 = vxpose.xlu0.b32.cont [14/16] 0.0, 128
        %935 = vxpose.xlu0.b32.cont [15/16] 0.0, 128
        %936 = vxpose.xlu0.b32.end [16/16] 0.0, 128
        %v937 = vpop.trf.xlu0
        %v938 = vpop.trf.xlu0
        %v939 = vpop.trf.xlu0
        %v940 = vpop.trf.xlu0
        %v941 = vpop.trf.xlu0
        %v942 = vpop.trf.xlu0
        %v943 = vpop.trf.xlu0
        %v944 = vpop.trf.xlu0
        %v945 = vpop.trf.xlu0
        %v946 = vpop.trf.xlu0
        %v947 = vpop.trf.xlu0
        %v948 = vpop.trf.xlu0
        %v949 = vpop.trf.xlu0
        %v950 = vpop.trf.xlu0
        %v951 = vpop.trf.xlu0
        %v952 = vpop.trf.xlu0
        %953 = vxpose.xlu0.b32.start [1/16] %v757, 128
        %954 = vxpose.xlu0.b32.cont [2/16] %v758, 128
        %955 = vxpose.xlu0.b32.cont [3/16] 0.0, 128
        %956 = vxpose.xlu0.b32.cont [4/16] 0.0, 128
        %957 = vxpose.xlu0.b32.cont [5/16] 0.0, 128
        %958 = vxpose.xlu0.b32.cont [6/16] 0.0, 128
        %959 = vxpose.xlu0.b32.cont [7/16] 0.0, 128
        %960 = vxpose.xlu0.b32.cont [8/16] 0.0, 128
        %961 = vxpose.xlu0.b32.cont [9/16] 0.0, 128
        %962 = vxpose.xlu0.b32.cont [10/16] 0.0, 128
        %963 = vxpose.xlu0.b32.cont [11/16] 0.0, 128
        %964 = vxpose.xlu0.b32.cont [12/16] 0.0, 128
        %965 = vxpose.xlu0.b32.cont [13/16] 0.0, 128
        %966 = vxpose.xlu0.b32.cont [14/16] 0.0, 128
        %967 = vxpose.xlu0.b32.cont [15/16] 0.0, 128
        %968 = vxpose.xlu0.b32.end [16/16] 0.0, 128
        %v969 = vpop.trf.xlu0
        %v970 = vpop.trf.xlu0
        %v971 = vpop.trf.xlu0
        %v972 = vpop.trf.xlu0
        %v973 = vpop.trf.xlu0
        %v974 = vpop.trf.xlu0
        %v975 = vpop.trf.xlu0
        %v976 = vpop.trf.xlu0
        %v977 = vpop.trf.xlu0
        %v978 = vpop.trf.xlu0
        %v979 = vpop.trf.xlu0
        %v980 = vpop.trf.xlu0
        %v981 = vpop.trf.xlu0
        %v982 = vpop.trf.xlu0
        %v983 = vpop.trf.xlu0
        %v984 = vpop.trf.xlu0
        %985 = vxpose.xlu0.b32.start [1/16] %v759, 128
        %986 = vxpose.xlu0.b32.cont [2/16] %v760, 128
        %987 = vxpose.xlu0.b32.cont [3/16] 0.0, 128
        %988 = vxpose.xlu0.b32.cont [4/16] 0.0, 128
        %989 = vxpose.xlu0.b32.cont [5/16] 0.0, 128
        %990 = vxpose.xlu0.b32.cont [6/16] 0.0, 128
        %991 = vxpose.xlu0.b32.cont [7/16] 0.0, 128
        %992 = vxpose.xlu0.b32.cont [8/16] 0.0, 128
        %993 = vxpose.xlu0.b32.cont [9/16] 0.0, 128
        %994 = vxpose.xlu0.b32.cont [10/16] 0.0, 128
        %995 = vxpose.xlu0.b32.cont [11/16] 0.0, 128
        %996 = vxpose.xlu0.b32.cont [12/16] 0.0, 128
        %997 = vxpose.xlu0.b32.cont [13/16] 0.0, 128
        %998 = vxpose.xlu0.b32.cont [14/16] 0.0, 128
        %999 = vxpose.xlu0.b32.cont [15/16] 0.0, 128
        %1000 = vxpose.xlu0.b32.end [16/16] 0.0, 128
        %v1001 = vpop.trf.xlu0
        %v1002 = vpop.trf.xlu0
        %v1003 = vpop.trf.xlu0
        %v1004 = vpop.trf.xlu0
        %v1005 = vpop.trf.xlu0
        %v1006 = vpop.trf.xlu0
        %v1007 = vpop.trf.xlu0
        %v1008 = vpop.trf.xlu0
        %v1009 = vpop.trf.xlu0
        %v1010 = vpop.trf.xlu0
        %v1011 = vpop.trf.xlu0
        %v1012 = vpop.trf.xlu0
        %v1013 = vpop.trf.xlu0
        %v1014 = vpop.trf.xlu0
        %v1015 = vpop.trf.xlu0
        %v1016 = vpop.trf.xlu0
        %v1017 = vpack.c.bf16 %v778, %v777
        %v1018 = vpack.c.bf16 %v810, %v809
        %v1019 = vpack.c.bf16 %v842, %v841
        %v1020 = vpack.c.bf16 %v874, %v873
        %v1021 = vpack.c.bf16 %v906, %v905
        %v1022 = vpack.c.bf16 %v938, %v937
        %v1023 = vpack.c.bf16 %v970, %v969
        %v1024 = vpack.c.bf16 %v1002, %v1001
        %v1025 = vld [vmem:[%s3] sm:$0xf]
        %v1026 = vld [vmem:[%s3 + $0x4] sm:$0xf]
        %v1029 = vunpack.c.l.b16 %v1025
        %v1030 = vunpack.c.l.b16 %v1026
        %v1031 = vpack.c.b16 %v1030, %v1029
        %v1034 = vsel %vm518, %v1017, 0
        %v1037 = vsel %vm518, %v1018, 0
        %v1040 = vsel %vm518, %v1019, 0
        %v1043 = vsel %vm518, %v1020, 0
        %v1046 = vsel %vm518, %v1021, 0
        %v1049 = vsel %vm518, %v1022, 0
        %v1052 = vsel %vm518, %v1023, 0
        %v1055 = vsel %vm518, %v1024, 0
        %1057 = vmatprep.subr.bf16.mxu0 0
        %1058 = vmatpush1.bf16.msra.mxu0 %v1031
        %1059 = vmatprep.subr.bf16.mxu0 0
        %1060 = vmatpush1.bf16.msra.mxu0 0
        %1061 = vmatprep.subr.bf16.mxu0 0
        %1062 = vmatpush1.bf16.msra.mxu0 0
        %1063 = vmatprep.subr.bf16.mxu0 0
        %1064 = vmatpush1.bf16.msra.mxu0 0
        %1065 = vmatprep.subr.bf16.mxu0 0
        %1066 = vmatpush1.bf16.msra.mxu0 0
        %1067 = vmatprep.subr.bf16.mxu0 0
        %1068 = vmatpush1.bf16.msra.mxu0 0
        %1069 = vmatprep.subr.bf16.mxu0 0
        %1070 = vmatpush1.bf16.msra.mxu0 0
        %1071 = vmatprep.subr.bf16.mxu0 0
        %1072 = vmatpush1.bf16.msra.mxu0 0
        %1073 = vmatprep.subr.bf16.mxu0 0
        %1074 = vmatpush1.bf16.msra.mxu0 0
        %1075 = vmatprep.subr.bf16.mxu0 0
        %1076 = vmatpush1.bf16.msra.mxu0 0
        %1077 = vmatprep.subr.bf16.mxu0 0
        %1078 = vmatpush1.bf16.msra.mxu0 0
        %1079 = vmatprep.subr.bf16.mxu0 0
        %1080 = vmatpush1.bf16.msra.mxu0 0
        %1081 = vmatprep.subr.bf16.mxu0 0
        %1082 = vmatpush1.bf16.msra.mxu0 0
        %1083 = vmatprep.subr.bf16.mxu0 0
        %1084 = vmatpush1.bf16.msra.mxu0 0
        %1085 = vmatprep.subr.bf16.mxu0 0
        %1086 = vmatpush1.bf16.msra.mxu0 0
        %1087 = vmatprep.subr.bf16.mxu0 0
        %1088 = vmatpush1.bf16.msra.mxu0 0
        %1089 = vmatprep.mubr.bf16.mxu0 0
        %1090 = vmatmul.mubr.bf16.gmra.mrb[0].mxu0 %v1034
        %v1091 = vpop.f32.mrb[0].mxu0
        %v1092 = vadd.f32 0.0, %v1091
        %v1093 = vpop.f32.mrb[0].mxu0
        %v1094 = vpop.f32.mrb[0].mxu0
        %v1095 = vadd.f32 0.0, %v1094
        %v1096 = vpop.f32.mrb[0].mxu0
        %1097 = vmatprep.mubr.bf16.mxu0 0
        %1098 = vmatmul.mubr.bf16.gmra.mrb[0].mxu0 %v1037
        %v1099 = vpop.f32.mrb[0].mxu0
        %v1100 = vadd.f32 0.0, %v1099
        %v1101 = vpop.f32.mrb[0].mxu0
        %v1102 = vpop.f32.mrb[0].mxu0
        %v1103 = vadd.f32 0.0, %v1102
        %v1104 = vpop.f32.mrb[0].mxu0
        %1105 = vmatprep.mubr.bf16.mxu0 0
        %1106 = vmatmul.mubr.bf16.gmra.mrb[0].mxu0 %v1040
        %v1107 = vpop.f32.mrb[0].mxu0
        %v1108 = vadd.f32 0.0, %v1107
        %v1109 = vpop.f32.mrb[0].mxu0
        %v1110 = vpop.f32.mrb[0].mxu0
        %v1111 = vadd.f32 0.0, %v1110
        %v1112 = vpop.f32.mrb[0].mxu0
        %1113 = vmatprep.mubr.bf16.mxu0 0
        %1114 = vmatmul.mubr.bf16.gmra.mrb[0].mxu0 %v1043
        %v1115 = vpop.f32.mrb[0].mxu0
        %v1116 = vadd.f32 0.0, %v1115
        %v1117 = vpop.f32.mrb[0].mxu0
        %v1118 = vpop.f32.mrb[0].mxu0
        %v1119 = vadd.f32 0.0, %v1118
        %v1120 = vpop.f32.mrb[0].mxu0
        %1121 = vmatprep.mubr.bf16.mxu0 0
        %1122 = vmatmul.mubr.bf16.gmra.mrb[0].mxu0 %v1046
        %v1123 = vpop.f32.mrb[0].mxu0
        %v1124 = vpop.f32.mrb[0].mxu0
        %v1125 = vpop.f32.mrb[0].mxu0
        %v1126 = vpop.f32.mrb[0].mxu0
        %1127 = vmatprep.mubr.bf16.mxu0 0
        %1128 = vmatmul.mubr.bf16.gmra.mrb[0].mxu0 %v1049
        %v1129 = vpop.f32.mrb[0].mxu0
        %v1130 = vpop.f32.mrb[0].mxu0
        %v1131 = vpop.f32.mrb[0].mxu0
        %v1132 = vpop.f32.mrb[0].mxu0
        %1133 = vmatprep.mubr.bf16.mxu0 0
        %1134 = vmatmul.mubr.bf16.gmra.mrb[0].mxu0 %v1052
        %v1135 = vpop.f32.mrb[0].mxu0
        %v1136 = vpop.f32.mrb[0].mxu0
        %v1137 = vpop.f32.mrb[0].mxu0
        %v1138 = vpop.f32.mrb[0].mxu0
        %1139 = vmatprep.mubr.bf16.mxu0 0
        %1140 = vmatmul.mubr.bf16.gmra.mrb[0].mxu0 %v1055
        %v1141 = vpop.f32.mrb[0].mxu0
        %v1142 = vpop.f32.mrb[0].mxu0
        %v1143 = vpop.f32.mrb[0].mxu0
        %v1144 = vpop.f32.mrb[0].mxu0
        %1145 = vdwg.mxu0
        %v1146 = vld [vmem:[%s4] sm:$0xf]
        %v1147 = vld [vmem:[%s4 + $0x4] sm:$0xf]
        %v1150 = vunpack.c.l.b16 %v1146
        %v1151 = vunpack.c.l.b16 %v1147
        %v1152 = vpack.c.b16 %v1151, %v1150
        %1154 = vmatprep.subr.bf16.mxu0 0
        %1155 = vmatpush1.bf16.msra.mxu0 %v1152
        %1156 = vmatprep.subr.bf16.mxu0 0
        %1157 = vmatpush1.bf16.msra.mxu0 0
        %1158 = vmatprep.subr.bf16.mxu0 0
        %1159 = vmatpush1.bf16.msra.mxu0 0
        %1160 = vmatprep.subr.bf16.mxu0 0
        %1161 = vmatpush1.bf16.msra.mxu0 0
        %1162 = vmatprep.subr.bf16.mxu0 0
        %1163 = vmatpush1.bf16.msra.mxu0 0
        %1164 = vmatprep.subr.bf16.mxu0 0
        %1165 = vmatpush1.bf16.msra.mxu0 0
        %1166 = vmatprep.subr.bf16.mxu0 0
        %1167 = vmatpush1.bf16.msra.mxu0 0
        %1168 = vmatprep.subr.bf16.mxu0 0
        %1169 = vmatpush1.bf16.msra.mxu0 0
        %1170 = vmatprep.subr.bf16.mxu0 0
        %1171 = vmatpush1.bf16.msra.mxu0 0
        %1172 = vmatprep.subr.bf16.mxu0 0
        %1173 = vmatpush1.bf16.msra.mxu0 0
        %1174 = vmatprep.subr.bf16.mxu0 0
        %1175 = vmatpush1.bf16.msra.mxu0 0
        %1176 = vmatprep.subr.bf16.mxu0 0
        %1177 = vmatpush1.bf16.msra.mxu0 0
        %1178 = vmatprep.subr.bf16.mxu0 0
        %1179 = vmatpush1.bf16.msra.mxu0 0
        %1180 = vmatprep.subr.bf16.mxu0 0
        %1181 = vmatpush1.bf16.msra.mxu0 0
        %1182 = vmatprep.subr.bf16.mxu0 0
        %1183 = vmatpush1.bf16.msra.mxu0 0
        %1184 = vmatprep.subr.bf16.mxu0 0
        %1185 = vmatpush1.bf16.msra.mxu0 0
        %1186 = vmatprep.mubr.bf16.mxu0 0
        %1187 = vmatmul.mubr.bf16.gmra.mrb[0].mxu0 %v1034
        %v1188 = vpop.f32.mrb[0].mxu0
        %v1189 = vpop.f32.mrb[0].mxu0
        %v1190 = vpop.f32.mrb[0].mxu0
        %v1191 = vpop.f32.mrb[0].mxu0
        %1192 = vmatprep.mubr.bf16.mxu0 0
        %1193 = vmatmul.mubr.bf16.gmra.mrb[0].mxu0 %v1037
        %v1194 = vpop.f32.mrb[0].mxu0
        %v1195 = vpop.f32.mrb[0].mxu0
        %v1196 = vpop.f32.mrb[0].mxu0
        %v1197 = vpop.f32.mrb[0].mxu0
        %1198 = vmatprep.mubr.bf16.mxu0 0
        %1199 = vmatmul.mubr.bf16.gmra.mrb[0].mxu0 %v1040
        %v1200 = vpop.f32.mrb[0].mxu0
        %v1201 = vpop.f32.mrb[0].mxu0
        %v1202 = vpop.f32.mrb[0].mxu0
        %v1203 = vpop.f32.mrb[0].mxu0
        %1204 = vmatprep.mubr.bf16.mxu0 0
        %1205 = vmatmul.mubr.bf16.gmra.mrb[0].mxu0 %v1043
        %v1206 = vpop.f32.mrb[0].mxu0
        %v1207 = vpop.f32.mrb[0].mxu0
        %v1208 = vpop.f32.mrb[0].mxu0
        %v1209 = vpop.f32.mrb[0].mxu0
        %1210 = vmatprep.mubr.bf16.mxu0 0
        %1211 = vmatmul.mubr.bf16.gmra.mrb[0].mxu0 %v1046
        %v1212 = vpop.f32.mrb[0].mxu0
        %v1213 = vadd.f32 0.0, %v1212
        %v1214 = vpop.f32.mrb[0].mxu0
        %v1215 = vpop.f32.mrb[0].mxu0
        %v1216 = vadd.f32 0.0, %v1215
        %v1217 = vpop.f32.mrb[0].mxu0
        %1218 = vmatprep.mubr.bf16.mxu0 0
        %1219 = vmatmul.mubr.bf16.gmra.mrb[0].mxu0 %v1049
        %v1220 = vpop.f32.mrb[0].mxu0
        %v1221 = vadd.f32 0.0, %v1220
        %v1222 = vpop.f32.mrb[0].mxu0
        %v1223 = vpop.f32.mrb[0].mxu0
        %v1224 = vadd.f32 0.0, %v1223
        %v1225 = vpop.f32.mrb[0].mxu0
        %1226 = vmatprep.mubr.bf16.mxu0 0
        %1227 = vmatmul.mubr.bf16.gmra.mrb[0].mxu0 %v1052
        %v1228 = vpop.f32.mrb[0].mxu0
        %v1229 = vadd.f32 0.0, %v1228
        %v1230 = vpop.f32.mrb[0].mxu0
        %v1231 = vpop.f32.mrb[0].mxu0
        %v1232 = vadd.f32 0.0, %v1231
        %v1233 = vpop.f32.mrb[0].mxu0
        %1234 = vmatprep.mubr.bf16.mxu0 0
        %1235 = vmatmul.mubr.bf16.gmra.mrb[0].mxu0 %v1055
        %v1236 = vpop.f32.mrb[0].mxu0
        %v1237 = vadd.f32 0.0, %v1236
        %v1238 = vpop.f32.mrb[0].mxu0
        %v1239 = vpop.f32.mrb[0].mxu0
        %v1240 = vadd.f32 0.0, %v1239
        %v1241 = vpop.f32.mrb[0].mxu0
        %1242 = vdwg.mxu0
        %v1243 = vadd.f32 %v1092, %v1213
        %v1244 = vadd.f32 %v1095, %v1216
        %v1245 = vadd.f32 %v1100, %v1221
        %v1246 = vadd.f32 %v1103, %v1224
        %v1247 = vadd.f32 %v1108, %v1229
        %v1248 = vadd.f32 %v1111, %v1232
        %v1249 = vadd.f32 %v1116, %v1237
        %v1250 = vadd.f32 %v1119, %v1240
        %1251 = vst.msk [vmem:[%s271] sm:$0xff] %vm518, %v1243
        %1252 = vst.msk [vmem:[%s271 + $0x8] sm:$0xff] %vm518, %v1244
        %1253 = vst.msk [vmem:[%s271 + $0x10] sm:$0xff] %vm518, %v1245
        %1254 = vst.msk [vmem:[%s271 + $0x18] sm:$0xff] %vm518, %v1246
        %1255 = vst.msk [vmem:[%s271 + $0x20] sm:$0xff] %vm518, %v1247
        %1256 = vst.msk [vmem:[%s271 + $0x28] sm:$0xff] %vm518, %v1248
        %1257 = vst.msk [vmem:[%s271 + $0x30] sm:$0xff] %vm518, %v1249
        %1258 = vst.msk [vmem:[%s271 + $0x38] sm:$0xff] %vm518, %v1250
        %s1259 = sand.u32 %s181, 1
        %s1260 = scalar_lea.sflag [#allocation3], %s1259
        %s1261 = sand.u32 %s181, 1
        %s1262 = smul.addr %s1261, 64
        %s1263 = scalar_lea.vmem [#allocation2], %s1262
        // Predicated region
        $region49: #{fourier_unit.5} parent=47 // pred_check
          %p1264 = pneg %p191
        $region50: #{fourier_unit.5} parent=47 // pred_check_branch
          %1266 = sbr.rel (%p1264) target = $region52
        $region51: #{fourier_unit.5} parent=47 // pred_region
          %s1268 = ssub.s32 1024, 1024
          %1269 = vsyncadd %s1260, %s1268
          %s1270 = smul.addr %s21, 8
          %s1271 = smul.addr %s1270, 128
          %s1272 = scalar_lea.hbm %s7, %s1271
          %s1273 = sshll.u32 %s1263, 4
          %s1274 = int_to_ptr.vmem [resolvable:$true] %s1273
          %1279 = dma.vmem_to_hbm [thread:$0]  %s1274, 1024, %s1272, %s1260, 128, 128, 8
        $region52: #{fourier_unit.5} parent=47 // pred_fallthru
          _
      $region48: #{fourier_unit.5} parent=5 // pred_fallthru
        _
      %p1280 = scmp.le.s32.totalorder 2, %s16
      // Predicated region
      $region53: #{fourier_unit.5} parent=5 // pred_check
        %p1281 = pneg %p1280
      $region54: #{fourier_unit.5} parent=5 // pred_check_branch
        %1283 = sbr.rel (%p1281) target = $region56
      $region55: #{fourier_unit.5} parent=5 // pred_region
        %s1284 = ssub.s32 %s16, 2
        // Predicated region
        $region57: #{fourier_unit.5} parent=55 // pred_check
          %p1285 = pneg %p197
        $region58: #{fourier_unit.5} parent=55 // pred_check_branch
          %1287 = sbr.rel (%p1285) target = $region60
        $region59: #{fourier_unit.5} parent=55 // pred_region
          %s1288 = sand.u32 %s182, 1
          %s1289 = scalar_lea.sflag [#allocation3], %s1288
          %s1290 = sand.u32 %s182, 1
          %s1291 = smul.addr %s1290, 64
          %s1292 = scalar_lea.vmem [#allocation2], %s1291
          %1293 = dma.done %s1289, 1024
        $region60: #{fourier_unit.5} parent=55 // pred_fallthru
          _
      $region56: #{fourier_unit.5} parent=5 // pred_fallthru
        _
    $region6: #{fourier_unit.5} parent=1 // loop_footer
      %s20 = sadd.s32 1, %s16
    $region7: #{fourier_unit.5} parent=1 // loop_footer_branch
      %15 = sbr.rel target = $region3
    $region8: #{fourier_unit.5} parent=1 // loop_exit
      _
    %1294 = vsyncpa [#allocation3], 1
    %s1295 = scalar_lea.sflag [#allocation3], 1
    %1296 = vsyncpa %s1295, 1

</llo_original>
